<compile_context>
chip_gen: v7x
topology: tpu7x:2x2x1
jax: 0.10.0
libtpu: 0.0.40
codegen_flags: <defaults>
</compile_context>

<pallas_src>
import functools

import jax
import jax.numpy as jnp
from jax.experimental import pallas as pl
from jax.experimental.pallas import tpu as pltpu


def _round_up(a: int, m: int) -> int:
    return (a + m - 1) // m * m


def _mdn_kernel(x_ref, w1_ref, b1_ref, wh_ref, bh_ref, out_ref, h_acc, *, num_mix):
    """Grid = (batch_blocks, F_in // TK). Reduction axis (k) is last.

    x:  (TB, TK) bf16      w1: (TK, H) bf16    b1: (1, H) f32
    wh: (H, OUT_PAD) bf16  bh: (1, OUT_PAD) f32
    out: (TB, OUT_PAD) f32; h_acc scratch: (TB, H) f32
    """
    k = pl.program_id(1)

    @pl.when(k == 0)
    def _():
        h_acc[...] = jnp.zeros_like(h_acc)

    # Partial hidden projection for this F_in chunk (bf16 MXU, f32 accumulate).
    h_acc[...] += jnp.dot(x_ref[...], w1_ref[...], preferred_element_type=jnp.float32)

    @pl.when(k == pl.num_programs(1) - 1)
    def _():
        h = h_acc[...] + b1_ref[...]                       # (TB, H) f32, dropout = identity
        # Single fused head matmul over all 3 heads (+ zero padding to 128 lanes).
        z = jnp.dot(h.astype(wh_ref.dtype), wh_ref[...],
                    preferred_element_type=jnp.float32) + bh_ref[...]  # (TB, OUT_PAD)

        col = jax.lax.broadcasted_iota(jnp.int32, z.shape, 1)
        is_pi = col < num_mix
        is_sigma = jnp.logical_and(col >= 2 * num_mix, col < 3 * num_mix)

        # Row-wise softmax restricted to the pi columns (max-stabilized).
        pi_logits = jnp.where(is_pi, z, -jnp.inf)
        m = jnp.max(pi_logits, axis=-1, keepdims=True)
        e = jnp.where(is_pi, jnp.exp(pi_logits - m), 0.0)
        denom = jnp.sum(e, axis=-1, keepdims=True)
        pi = e * pl.reciprocal(denom, approx=True)

        sigma = jnp.exp(z)

        # One lane-dense store: [pi | mean | exp(sigma) | 0-padding].
        out_ref[...] = jnp.where(is_pi, pi, jnp.where(is_sigma, sigma, z))


def tlmdn_head_forward(x_nchw, params, *, tk=512):
    """x_nchw: (B, C, H, W) float32. params: per-head weights as in the PyTorch module.

    Returns (B, 3*K) float32 = [softmax(pi) | mean | exp(sigma)].
    """
    w1, b1, wpi, bpi, wmu, bmu, wsg, bsg = params
    F_in, H = w1.shape
    K = wpi.shape[1]

    B = x_nchw.shape[0]
    x2d = x_nchw.reshape(B, -1)  # nn.Flatten semantics (row-major over C,H,W)
    assert x2d.shape[1] == F_in

    # --- batch padding / tiling (sublane-friendly, megacore-shardable) -------
    SUB = 16  # bf16 sublane granule
    TB = min(_round_up(B, SUB), 128)
    B_pad = _round_up(B, TB)

    x2d = x2d.astype(jnp.bfloat16)
    if B_pad != B:
        x2d = jnp.pad(x2d, ((0, B_pad - B), (0, 0)))

    # --- feature-reduction tiling --------------------------------------------
    TK = min(tk, F_in)
    assert F_in % TK == 0, "in_features must be divisible by the reduction tile"

    # --- fuse + lane-pad the three head weights ------------------------------
    OUT_PAD = _round_up(3 * K, 128)
    w_heads = jnp.concatenate([wpi, wmu, wsg], axis=1)          # (H, 3K)
    b_heads = jnp.concatenate([bpi, bmu, bsg], axis=1)          # (1, 3K)
    w_heads = jnp.pad(w_heads, ((0, 0), (0, OUT_PAD - 3 * K))).astype(jnp.bfloat16)
    b_heads = jnp.pad(b_heads, ((0, 0), (0, OUT_PAD - 3 * K))).astype(jnp.float32)
    w1_b = w1.astype(jnp.bfloat16)
    b1_f = b1.astype(jnp.float32)

    cost = pl.CostEstimate(
        flops=2 * B_pad * F_in * H + 2 * B_pad * H * OUT_PAD,
        transcendentals=B_pad * (OUT_PAD + 3 * K),
        bytes_accessed=(B_pad * F_in * 2          # x (bf16)
                        + F_in * H * 2            # w1 (bf16)
                        + H * OUT_PAD * 2         # fused head weights (bf16)
                        + H * 4 + OUT_PAD * 4     # biases (f32)
                        + B_pad * OUT_PAD * 4),   # output (f32)
    )

    out = pl.pallas_call(
        functools.partial(_mdn_kernel, num_mix=K),
        out_shape=jax.ShapeDtypeStruct((B_pad, OUT_PAD), jnp.float32),
        grid=(B_pad // TB, F_in // TK),
        in_specs=[
            pl.BlockSpec((TB, TK), lambda i, k: (i, k)),        # x
            pl.BlockSpec((TK, H), lambda i, k: (k, 0)),         # w1 chunk (pipelined)
            pl.BlockSpec((1, H), lambda i, k: (0, 0)),          # b1
            pl.BlockSpec((H, OUT_PAD), lambda i, k: (0, 0)),    # fused head weights
            pl.BlockSpec((1, OUT_PAD), lambda i, k: (0, 0)),    # fused head biases
        ],
        out_specs=pl.BlockSpec((TB, OUT_PAD), lambda i, k: (i, 0)),
        scratch_shapes=[pltpu.VMEM((TB, H), jnp.float32)],
        compiler_params=pltpu.CompilerParams(
            dimension_semantics=("parallel", "arbitrary"),
        ),
        cost_estimate=cost,
    )(x2d, w1_b, b1_f, w_heads, b_heads)

    return out[:B, :3 * K]


def init_params(key, in_features, hidden, mixture_components):
    ks = jax.random.split(key, 8)
    scale1 = 1.0 / jnp.sqrt(in_features)
    scale2 = 1.0 / jnp.sqrt(hidden)
    w1 = jax.random.uniform(ks[0], (in_features, hidden), jnp.float32, -scale1, scale1)
    b1 = jax.random.uniform(ks[1], (1, hidden), jnp.float32, -scale1, scale1)
    wpi = jax.random.uniform(ks[2], (hidden, mixture_components), jnp.float32, -scale2, scale2)
    bpi = jax.random.uniform(ks[3], (1, mixture_components), jnp.float32, -scale2, scale2)
    wmu = jax.random.uniform(ks[4], (hidden, mixture_components), jnp.float32, -scale2, scale2)
    bmu = jax.random.uniform(ks[5], (1, mixture_components), jnp.float32, -scale2, scale2)
    wsg = jax.random.uniform(ks[6], (hidden, mixture_components), jnp.float32, -scale2, scale2)
    bsg = jax.random.uniform(ks[7], (1, mixture_components), jnp.float32, -scale2, scale2)
    return (w1, b1, wpi, bpi, wmu, bmu, wsg, bsg)


if __name__ == "__main__":
    key = jax.random.PRNGKey(0)
    kx, kp = jax.random.split(key)

    B, C, Hs, Ws = 2, 4, 16, 16          # -> in_features = 1024
    in_features = C * Hs * Ws
    hidden = 512
    K = 8                                 # mixture components

    x = jax.random.normal(kx, (B, C, Hs, Ws), dtype=jnp.float32)
    params = init_params(kp, in_features, hidden, K)

    out = tlmdn_head_forward(x, params)
    out = jax.block_until_ready(out)

    # Reference in plain JAX using the same bf16-rounded operands the kernel sees
    # (eval-mode dropout = identity), so only accumulation order / approx-recip differ.
    w1, b1, wpi, bpi, wmu, bmu, wsg, bsg = params
    x2d = x.reshape(B, -1).astype(jnp.bfloat16).astype(jnp.float32)
    w1f = w1.astype(jnp.bfloat16).astype(jnp.float32)
    wpif = wpi.astype(jnp.bfloat16).astype(jnp.float32)
    wmuf = wmu.astype(jnp.bfloat16).astype(jnp.float32)
    wsgf = wsg.astype(jnp.bfloat16).astype(jnp.float32)
    h = x2d @ w1f + b1
    hb = h.astype(jnp.bfloat16).astype(jnp.float32)
    pi_ref = jax.nn.softmax(hb @ wpif + bpi, axis=1)
    mean_ref = hb @ wmuf + bmu
    sigma_ref = jnp.exp(hb @ wsgf + bsg)
    ref = jnp.concatenate([pi_ref, mean_ref, sigma_ref], axis=1)

    assert out.shape == (B, 3 * K)
    assert jnp.allclose(out, ref, atol=5e-3, rtol=5e-3), (
        f"max abs diff = {jnp.max(jnp.abs(out - ref))}")

    print("KERNEL_OK")
</pallas_src>

<mosaic_0001>
module attributes {stable_mosaic.version = 11 : i64} {
  func.func @_mdn_kernel(%arg0: i32, %arg1: i32, %arg2: memref<16x512xbf16, #tpu.memory_space<vmem>>, %arg3: memref<512x512xbf16, #tpu.memory_space<vmem>>, %arg4: memref<1x512xf32, #tpu.memory_space<vmem>>, %arg5: memref<512x128xbf16, #tpu.memory_space<vmem>>, %arg6: memref<1x128xf32, #tpu.memory_space<vmem>>, %arg7: memref<16x128xf32, #tpu.memory_space<vmem>>, %arg8: memref<16x512xf32, #tpu.memory_space<vmem>>) attributes {dimension_semantics = [#tpu.dimension_semantics<parallel>, #tpu.dimension_semantics<arbitrary>], iteration_bounds = array<i64: 1, 2>, scalar_prefetch = 0 : i64, scratch_operands = 1 : i64, tpu.core_type = #tpu.core_type<tc>, window_params = [{transform_indices = @transform_0, window_bounds = array<i64: 16, 512>}, {transform_indices = @transform_1, window_bounds = array<i64: 512, 512>}, {pipeline_mode = #tpu.pipeline_mode<synchronous>, transform_indices = @transform_2, window_bounds = array<i64: 1, 512>}, {pipeline_mode = #tpu.pipeline_mode<synchronous>, transform_indices = @transform_3, window_bounds = array<i64: 512, 128>}, {pipeline_mode = #tpu.pipeline_mode<synchronous>, transform_indices = @transform_4, window_bounds = array<i64: 1, 128>}, {transform_indices = @transform_5, window_bounds = array<i64: 16, 128>}]} {
    %c0_i32 = arith.constant 0 : i32
    %0 = arith.cmpi eq, %arg1, %c0_i32 : i32
    %1 = arith.extui %0 : i1 to i32
    %c0_i32_0 = arith.constant 0 : i32
    %2 = arith.cmpi ne, %1, %c0_i32_0 : i32
    scf.if %2 {
      %cst_9 = arith.constant 0.000000e+00 : f32
      %12 = vector.broadcast %cst_9 : f32 to vector<16x512xf32>
      %c0_10 = arith.constant 0 : index
      %c0_11 = arith.constant 0 : index
      %13 = vector.load %arg8[%c0_10, %c0_11] : memref<16x512xf32, #tpu.memory_space<vmem>>, vector<16x512xf32>
      tpu.vector_store %arg8[%c0_10, %c0_11], %12 {strides = array<i32>} : memref<16x512xf32, #tpu.memory_space<vmem>>, vector<16x512xf32>,
    } else {
    }
    %c0 = arith.constant 0 : index
    %c0_1 = arith.constant 0 : index
    %3 = vector.load %arg8[%c0, %c0_1] : memref<16x512xf32, #tpu.memory_space<vmem>>, vector<16x512xf32>
    %c0_2 = arith.constant 0 : index
    %c0_3 = arith.constant 0 : index
    %4 = vector.load %arg2[%c0_2, %c0_3] : memref<16x512xbf16, #tpu.memory_space<vmem>>, vector<16x512xbf16>
    %c0_4 = arith.constant 0 : index
    %c0_5 = arith.constant 0 : index
    %5 = vector.load %arg3[%c0_4, %c0_5] : memref<512x512xbf16, #tpu.memory_space<vmem>>, vector<512x512xbf16>
    %cst = arith.constant dense<0.000000e+00> : vector<16x512xf32>
    %6 = tpu.matmul %4, %5, %cst {dimension_numbers = #tpu.dot_dimension_numbers<[1], [0], [0], [1], [0, 0, 1, 1], [], []>} : vector<16x512xbf16>, vector<512x512xbf16>, vector<16x512xf32> -> vector<16x512xf32>
    %7 = arith.addf %3, %6 : vector<16x512xf32>
    %c0_6 = arith.constant 0 : index
    %c0_7 = arith.constant 0 : index
    %8 = vector.load %arg8[%c0_6, %c0_7] : memref<16x512xf32, #tpu.memory_space<vmem>>, vector<16x512xf32>
    tpu.vector_store %arg8[%c0_6, %c0_7], %7 {strides = array<i32>} : memref<16x512xf32, #tpu.memory_space<vmem>>, vector<16x512xf32>,
    %c1_i32 = arith.constant 1 : i32
    %9 = arith.cmpi eq, %arg1, %c1_i32 : i32
    %10 = arith.extui %9 : i1 to i32
    %c0_i32_8 = arith.constant 0 : i32
    %11 = arith.cmpi ne, %10, %c0_i32_8 : i32
    scf.if %11 {
      %c0_9 = arith.constant 0 : index
      %c0_10 = arith.constant 0 : index
      %12 = vector.load %arg8[%c0_9, %c0_10] : memref<16x512xf32, #tpu.memory_space<vmem>>, vector<16x512xf32>
      %c0_11 = arith.constant 0 : index
      %c0_12 = arith.constant 0 : index
      %13 = vector.load %arg4[%c0_11, %c0_12] : memref<1x512xf32, #tpu.memory_space<vmem>>, vector<1x512xf32>
      %14 = vector.broadcast %13 : vector<1x512xf32> to vector<16x512xf32>
      %15 = arith.addf %12, %14 : vector<16x512xf32>
      %16 = arith.truncf %15 : vector<16x512xf32> to vector<16x512xbf16>
      %c0_13 = arith.constant 0 : index
      %c0_14 = arith.constant 0 : index
      %17 = vector.load %arg5[%c0_13, %c0_14] : memref<512x128xbf16, #tpu.memory_space<vmem>>, vector<512x128xbf16>
      %cst_15 = arith.constant dense<0.000000e+00> : vector<16x128xf32>
      %18 = tpu.matmul %16, %17, %cst_15 {dimension_numbers = #tpu.dot_dimension_numbers<[1], [0], [0], [1], [0, 0, 1, 1], [], []>} : vector<16x512xbf16>, vector<512x128xbf16>, vector<16x128xf32> -> vector<16x128xf32>
      %c0_16 = arith.constant 0 : index
      %c0_17 = arith.constant 0 : index
      %19 = vector.load %arg6[%c0_16, %c0_17] : memref<1x128xf32, #tpu.memory_space<vmem>>, vector<1x128xf32>
      %20 = vector.broadcast %19 : vector<1x128xf32> to vector<16x128xf32>
      %21 = arith.addf %18, %20 : vector<16x128xf32>
      %22 = tpu.iota {dimensions = array<i32: 1>} : vector<16x128xi32>
      %c8_i32 = arith.constant 8 : i32
      %23 = vector.broadcast %c8_i32 : i32 to vector<16x128xi32>
      %24 = arith.cmpi slt, %22, %23 : vector<16x128xi32>
      %c16_i32 = arith.constant 16 : i32
      %25 = vector.broadcast %c16_i32 : i32 to vector<16x128xi32>
      %26 = arith.cmpi sge, %22, %25 : vector<16x128xi32>
      %c24_i32 = arith.constant 24 : i32
      %27 = vector.broadcast %c24_i32 : i32 to vector<16x128xi32>
      %28 = arith.cmpi slt, %22, %27 : vector<16x128xi32>
      %29 = arith.andi %26, %28 : vector<16x128xi1>
      %cst_18 = arith.constant 0xFF800000 : f32
      %30 = vector.broadcast %cst_18 : f32 to vector<16x128xf32>
      %31 = arith.select %24, %21, %30 : vector<16x128xi1>, vector<16x128xf32>
      %cst_19 = arith.constant dense<0xFF800000> : vector<16xf32>
      %32 = vector.multi_reduction <maximumf>, %31, %cst_19 [1] : vector<16x128xf32> to vector<16xf32>
      %33 = vector.shape_cast %32 : vector<16xf32> to vector<16x1xf32>
      %34 = vector.broadcast %33 : vector<16x1xf32> to vector<16x128xf32>
      %35 = arith.subf %31, %34 : vector<16x128xf32>
      %36 = math.exp %35 : vector<16x128xf32>
      %cst_20 = arith.constant 0.000000e+00 : f32
      %37 = vector.broadcast %cst_20 : f32 to vector<16x128xf32>
      %38 = arith.select %24, %36, %37 : vector<16x128xi1>, vector<16x128xf32>
      %cst_21 = arith.constant dense<0.000000e+00> : vector<16xf32>
      %39 = vector.multi_reduction <add>, %38, %cst_21 [1] : vector<16x128xf32> to vector<16xf32>
      %40 = vector.shape_cast %39 : vector<16xf32> to vector<16x1xf32>
      %41 = tpu.reciprocal %40 {approx = true} : vector<16x1xf32> -> vector<16x1xf32>
      %42 = vector.broadcast %41 : vector<16x1xf32> to vector<16x128xf32>
      %43 = arith.mulf %38, %42 : vector<16x128xf32>
      %44 = math.exp %21 : vector<16x128xf32>
      %45 = arith.select %29, %44, %21 : vector<16x128xi1>, vector<16x128xf32>
      %46 = arith.select %24, %43, %45 : vector<16x128xi1>, vector<16x128xf32>
      %c0_22 = arith.constant 0 : index
      %c0_23 = arith.constant 0 : index
      %47 = vector.load %arg7[%c0_22, %c0_23] : memref<16x128xf32, #tpu.memory_space<vmem>>, vector<16x128xf32>
      tpu.vector_store %arg7[%c0_22, %c0_23], %46 {strides = array<i32>} : memref<16x128xf32, #tpu.memory_space<vmem>>, vector<16x128xf32>,
    } else {
    }
    return
  }
  func.func @transform_0(%arg0: i32, %arg1: i32) -> (i32, i32) {
    %c0_i32 = arith.constant 0 : i32
    return %arg0, %arg1 : i32, i32
  }
  func.func @transform_1(%arg0: i32, %arg1: i32) -> (i32, i32) {
    %c0_i32 = arith.constant 0 : i32
    %c0_i32_0 = arith.constant 0 : i32
    return %arg1, %c0_i32 : i32, i32
  }
  func.func @transform_2(%arg0: i32, %arg1: i32) -> (i32, i32) {
    %c0_i32 = arith.constant 0 : i32
    %c0_i32_0 = arith.constant 0 : i32
    %c0_i32_1 = arith.constant 0 : i32
    return %c0_i32, %c0_i32_0 : i32, i32
  }
  func.func @transform_3(%arg0: i32, %arg1: i32) -> (i32, i32) {
    %c0_i32 = arith.constant 0 : i32
    %c0_i32_0 = arith.constant 0 : i32
    %c0_i32_1 = arith.constant 0 : i32
    return %c0_i32, %c0_i32_0 : i32, i32
  }
  func.func @transform_4(%arg0: i32, %arg1: i32) -> (i32, i32) {
    %c0_i32 = arith.constant 0 : i32
    %c0_i32_0 = arith.constant 0 : i32
    %c0_i32_1 = arith.constant 0 : i32
    return %c0_i32, %c0_i32_0 : i32, i32
  }
  func.func @transform_5(%arg0: i32, %arg1: i32) -> (i32, i32) {
    %c0_i32 = arith.constant 0 : i32
    %c0_i32_0 = arith.constant 0 : i32
    return %arg0, %c0_i32 : i32, i32
  }
}

</mosaic_0001>

<llo_original>
// kernel: tpu_custom_call.1
$region0: #{tpu_custom_call.1}
  #allocation0 [shape = 'u32[]', space=smem, size = 0x4, offset = 0x4, fixed_abs, tag = 'smem constant byte address 0x4 - core index']
  #allocation1 [shape = 'u32[144,128]{1,0:T(1,128)}', space=vmem, size = 0x12000, scoped, tag = 'internal scratch']
  #allocation2 [shape = 'f32[16,512]{1,0:T(8,128)}', space=vmem, size = 0x8000, scoped, tag = 'scratch operand']
  %s0 = inlined_call_operand.hbm [shape: bf16[16,1024], index: 0, kind: input, shape index: {}]
  %s1 = inlined_call_operand.hbm [shape: bf16[1024,512], index: 1, kind: input, shape index: {}]
  %s2 = inlined_call_operand.vmem [shape: f32[1,512], index: 2, kind: input, shape index: {}]
  %s3 = inlined_call_operand.hbm [shape: bf16[512,128], index: 3, kind: input, shape index: {}]
  %s4 = inlined_call_operand.vmem [shape: f32[1,128], index: 4, kind: input, shape index: {}]
  %s5 = inlined_call_operand.hbm [shape: f32[16,128], index: 5, kind: output, shape index: {}]
  %s6 = sld [smem:[#allocation0]]
  $region73: #{tpu_custom_call.1} parent=0
    _
  %s8 = ssub.s32 1, %s6
  %s9 = scalar_select 0, %s8, %s6
  $region1: #{tpu_custom_call.1} parent=0
    #allocation3 [shape = 'u8[32768]{0}', space=vmem, size = 0x8000, scoped, tag = 'input window, operand 0']
    #allocation4 [shape = 's32[2]{0}', space=sflag, size = 0x8, scoped, tag = 'scoped memory for tpu_custom_call.1']
    #allocation5 [shape = 's32[2]{0}', space=sflag, size = 0x8, scoped, tag = 'scoped memory for tpu_custom_call.1']
    #allocation6 [shape = 'u8[1048576]{0}', space=vmem, size = 0x100000, scoped, tag = 'input window, operand 1']
    #allocation7 [shape = 's32[2]{0}', space=sflag, size = 0x8, scoped, tag = 'scoped memory for tpu_custom_call.1']
    #allocation8 [shape = 'u8[131072]{0}', space=vmem, size = 0x20000, scoped, tag = 'input window, operand 3, single buffered']
    #allocation9 [shape = 'u8[8192]{0}', space=vmem, size = 0x2000, scoped, tag = 'output window, operand 0, single buffered']
    %10 = vsyncpa [#allocation4], 0
    %s11 = scalar_lea.sflag [#allocation4], 1
    %12 = vsyncpa %s11, 0
    %13 = vsyncpa [#allocation7], 0
    %s14 = scalar_lea.sflag [#allocation7], 1
    %15 = vsyncpa %s14, 0
    %16 = vsyncpa [#allocation5], 0
    loop: start=0, step=1, limit=4
    $region2: #{tpu_custom_call.1} parent=1 // loop_pre_header
      _
    $region3: #{tpu_custom_call.1} parent=1 // loop_header
      %s18 = sphi 0, %s22
      %p19 = scmp.ge.s32.totalorder %s18, 4
      %s25 = sphi 0, %s37
      %s26 = sphi 0, %s33
      %s27 = sphi 0, %s25
      %s28 = sphi 0, %s26
      %s29 = sphi 0, %s27
      %s30 = sphi 0, %s28
      %s42 = sphi 0, %s44
      %s45 = sphi 0, %s42
      %s46 = sphi 0, %s45
      %s62 = sphi 0, %s46
      %s68 = sphi 0, %s70
      %s71 = sphi 0, %s68
      %s72 = sphi 0, %s71
      %s88 = sphi 0, %s72
      %s92 = sphi 0, %s92
      %s94 = sphi 0, %s92
      %s95 = sphi 0, %s94
      %s109 = sphi 0, %s95
      %s113 = sphi 0, %s113
      %s115 = sphi 0, %s113
      %s116 = sphi 0, %s115
      %s130 = sphi 0, %s116
      %s134 = sphi 0, %s134
      %s136 = sphi 0, %s134
      %s137 = sphi 0, %s136
      %s151 = sphi 0, %s137
      %s157 = sphi 0, %s159
      %s160 = sphi 0, %s157
      %s161 = sphi 0, %s160
      %s177 = sphi 0, %s161
    $region4: #{tpu_custom_call.1} parent=1 // loop_header_branch
      %21 = sbr.rel (%p19) target = $region8
    $region5: #{tpu_custom_call.1} parent=1 // loop_body
      %s23 = ssub.s32 %s18, 1
      %s24 = ssub.s32 %s18, 2
      %s31 = sadd.s32 1, %s26
      %p32 = scmp.ge.s32.totalorder %s31, 2
      %s33 = scalar_select %p32, 0, %s31
      %s34 = sadd.s32 1, %s25
      %s35 = scalar_select %p32, %s34, %s25
      %p36 = scmp.ge.s32.totalorder %s35, 1
      %s37 = scalar_select %p36, 0, %s35
      %s38 = ssub.s32 %s25, %s37
      %s39 = ssub.s32 %s26, %s33
      %s40 = sor.u32 %s38, %s39
      %p41 = scmp.eq.s32.totalorder %s40, 0
      %s43 = sadd.s32 %s42, 1
      %s44 = scalar_select %p41, %s42, %s43
      %p47 = pneg %p41
      %p48 = scmp.eq.s32.totalorder %s18, 1
      %p49 = por %p47, %p48
      %p50 = scmp.ne.s32.totalorder %s42, %s45
      %p51 = scmp.eq.s32.totalorder %s18, 0
      %p52 = por %p50, %p51
      %p53 = scmp.ne.s32.totalorder %s42, %s45
      %p54 = scmp.eq.s32.totalorder %s23, 1
      %p55 = por %p53, %p54
      %p56 = scmp.ne.s32.totalorder %s45, %s46
      %p57 = scmp.eq.s32.totalorder %s23, 0
      %p58 = por %p56, %p57
      %p59 = scmp.ne.s32.totalorder %s45, %s46
      %p60 = scmp.eq.s32.totalorder %s24, 1
      %p61 = por %p59, %p60
      %p63 = scmp.ne.s32.totalorder %s46, %s62
      %p64 = scmp.eq.s32.totalorder %s24, 0
      %p65 = por %p63, %p64
      %s66 = ssub.s32 %s26, %s33
      %p67 = scmp.eq.s32.totalorder %s66, 0
      %s69 = sadd.s32 %s68, 1
      %s70 = scalar_select %p67, %s68, %s69
      %p73 = pneg %p67
      %p74 = scmp.eq.s32.totalorder %s18, 1
      %p75 = por %p73, %p74
      %p76 = scmp.ne.s32.totalorder %s68, %s71
      %p77 = scmp.eq.s32.totalorder %s18, 0
      %p78 = por %p76, %p77
      %p79 = scmp.ne.s32.totalorder %s68, %s71
      %p80 = scmp.eq.s32.totalorder %s23, 1
      %p81 = por %p79, %p80
      %p82 = scmp.ne.s32.totalorder %s71, %s72
      %p83 = scmp.eq.s32.totalorder %s23, 0
      %p84 = por %p82, %p83
      %p85 = scmp.ne.s32.totalorder %s71, %s72
      %p86 = scmp.eq.s32.totalorder %s24, 1
      %p87 = por %p85, %p86
      %p89 = scmp.ne.s32.totalorder %s72, %s88
      %p90 = scmp.eq.s32.totalorder %s24, 0
      %p91 = por %p89, %p90
      %s93 = sadd.s32 %s92, 1
      %p96 = scmp.eq.s32.totalorder %s18, 1
      %p97 = scmp.ne.s32.totalorder %s92, %s94
      %p98 = scmp.eq.s32.totalorder %s18, 0
      %p99 = por %p97, %p98
      %p100 = scmp.ne.s32.totalorder %s92, %s94
      %p101 = scmp.eq.s32.totalorder %s23, 1
      %p102 = por %p100, %p101
      %p103 = scmp.ne.s32.totalorder %s94, %s95
      %p104 = scmp.eq.s32.totalorder %s23, 0
      %p105 = por %p103, %p104
      %p106 = scmp.ne.s32.totalorder %s94, %s95
      %p107 = scmp.eq.s32.totalorder %s24, 1
      %p108 = por %p106, %p107
      %p110 = scmp.ne.s32.totalorder %s95, %s109
      %p111 = scmp.eq.s32.totalorder %s24, 0
      %p112 = por %p110, %p111
      %s114 = sadd.s32 %s113, 1
      %p117 = scmp.eq.s32.totalorder %s18, 1
      %p118 = scmp.ne.s32.totalorder %s113, %s115
      %p119 = scmp.eq.s32.totalorder %s18, 0
      %p120 = por %p118, %p119
      %p121 = scmp.ne.s32.totalorder %s113, %s115
      %p122 = scmp.eq.s32.totalorder %s23, 1
      %p123 = por %p121, %p122
      %p124 = scmp.ne.s32.totalorder %s115, %s116
      %p125 = scmp.eq.s32.totalorder %s23, 0
      %p126 = por %p124, %p125
      %p127 = scmp.ne.s32.totalorder %s115, %s116
      %p128 = scmp.eq.s32.totalorder %s24, 1
      %p129 = por %p127, %p128
      %p131 = scmp.ne.s32.totalorder %s116, %s130
      %p132 = scmp.eq.s32.totalorder %s24, 0
      %p133 = por %p131, %p132
      %s135 = sadd.s32 %s134, 1
      %p138 = scmp.eq.s32.totalorder %s18, 1
      %p139 = scmp.ne.s32.totalorder %s134, %s136
      %p140 = scmp.eq.s32.totalorder %s18, 0
      %p141 = por %p139, %p140
      %p142 = scmp.ne.s32.totalorder %s134, %s136
      %p143 = scmp.eq.s32.totalorder %s23, 1
      %p144 = por %p142, %p143
      %p145 = scmp.ne.s32.totalorder %s136, %s137
      %p146 = scmp.eq.s32.totalorder %s23, 0
      %p147 = por %p145, %p146
      %p148 = scmp.ne.s32.totalorder %s136, %s137
      %p149 = scmp.eq.s32.totalorder %s24, 1
      %p150 = por %p148, %p149
      %p152 = scmp.ne.s32.totalorder %s137, %s151
      %p153 = scmp.eq.s32.totalorder %s24, 0
      %p154 = por %p152, %p153
      %s155 = ssub.s32 %s25, %s37
      %p156 = scmp.eq.s32.totalorder %s155, 0
      %s158 = sadd.s32 %s157, 1
      %s159 = scalar_select %p156, %s157, %s158
      %p162 = pneg %p156
      %p163 = scmp.eq.s32.totalorder %s18, 1
      %p164 = por %p162, %p163
      %p165 = scmp.ne.s32.totalorder %s157, %s160
      %p166 = scmp.eq.s32.totalorder %s18, 0
      %p167 = por %p165, %p166
      %p168 = scmp.ne.s32.totalorder %s157, %s160
      %p169 = scmp.eq.s32.totalorder %s23, 1
      %p170 = por %p168, %p169
      %p171 = scmp.ne.s32.totalorder %s160, %s161
      %p172 = scmp.eq.s32.totalorder %s23, 0
      %p173 = por %p171, %p172
      %p174 = scmp.ne.s32.totalorder %s160, %s161
      %p175 = scmp.eq.s32.totalorder %s24, 1
      %p176 = por %p174, %p175
      %p178 = scmp.ne.s32.totalorder %s161, %s177
      %p179 = scmp.eq.s32.totalorder %s24, 0
      %p180 = por %p178, %p179
      %p181 = scmp.le.s32.totalorder 1, %s18
      %p182 = scmp.lt.s32.totalorder %s18, 3
      %p183 = pnand %p181, %p182
      %p184 = pneg %p183
      // Predicated region
      $region9: #{tpu_custom_call.1} parent=5 // pred_check
        _
      $region10: #{tpu_custom_call.1} parent=5 // pred_check_branch
        %186 = sbr.rel (%p183) target = $region12
      $region11: #{tpu_custom_call.1} parent=5 // pred_region
        %s187 = ssub.s32 %s18, 1
        // Predicated region
        $region13: #{tpu_custom_call.1} parent=11 // pred_check
          %p188 = pneg %p105
        $region14: #{tpu_custom_call.1} parent=11 // pred_check_branch
          %190 = sbr.rel (%p188) target = $region16
        $region15: #{tpu_custom_call.1} parent=11 // pred_region
          _
        $region16: #{tpu_custom_call.1} parent=11 // pred_fallthru
          _
        // Predicated region
        $region17: #{tpu_custom_call.1} parent=11 // pred_check
          %p191 = pneg %p126
        $region18: #{tpu_custom_call.1} parent=11 // pred_check_branch
          %193 = sbr.rel (%p191) target = $region20
        $region19: #{tpu_custom_call.1} parent=11 // pred_region
          %s195 = ssub.s32 4096, 4096
          %196 = vsyncadd [#allocation7], %s195
          %s197 = sshll.u32 [#allocation8], 4
          %s198 = int_to_ptr.vmem [resolvable:$true] %s197
          %203 = dma.hbm_to_vmem [thread:$0]  %s3, 4096, %s198, [#allocation7], 64, 64, 4
        $region20: #{tpu_custom_call.1} parent=11 // pred_fallthru
          _
        // Predicated region
        $region21: #{tpu_custom_call.1} parent=11 // pred_check
          %p204 = pneg %p147
        $region22: #{tpu_custom_call.1} parent=11 // pred_check_branch
          %206 = sbr.rel (%p204) target = $region24
        $region23: #{tpu_custom_call.1} parent=11 // pred_region
          _
        $region24: #{tpu_custom_call.1} parent=11 // pred_fallthru
          _
      $region12: #{tpu_custom_call.1} parent=5 // pred_fallthru
        _
      %p207 = scmp.lt.s32.totalorder %s18, 2
      // Predicated region
      $region25: #{tpu_custom_call.1} parent=5 // pred_check
        %p208 = pneg %p207
      $region26: #{tpu_custom_call.1} parent=5 // pred_check_branch
        %210 = sbr.rel (%p208) target = $region28
      $region27: #{tpu_custom_call.1} parent=5 // pred_region
        // Predicated region
        $region29: #{tpu_custom_call.1} parent=27 // pred_check
          %p211 = pneg %p52
        $region30: #{tpu_custom_call.1} parent=27 // pred_check_branch
          %213 = sbr.rel (%p211) target = $region32
        $region31: #{tpu_custom_call.1} parent=27 // pred_region
          %s214 = sand.u32 %s42, 1
          %s215 = scalar_lea.sflag [#allocation4], %s214
          %s216 = sand.u32 %s42, 1
          %s217 = smul.addr %s216, 32
          %s218 = scalar_lea.vmem [#allocation3], %s217
          %s219 = smul.u32 2, %s25
          %s220 = smul.u32 4, %s26
          %s222 = ssub.s32 512, 512
          %223 = vsyncadd %s215, %s222
          %s224 = smul.addr %s219, 8
          %s225 = sadd.s32 %s220, %s224
          %s226 = smul.addr %s225, 64
          %s227 = scalar_lea.hbm %s0, %s226
          %s228 = sshll.u32 %s218, 4
          %s229 = int_to_ptr.vmem [resolvable:$true] %s228
          %234 = dma.hbm_to_vmem [thread:$0]  %s227, 512, %s229, %s215, 512, 256, 16
        $region32: #{tpu_custom_call.1} parent=27 // pred_fallthru
          _
        // Predicated region
        $region33: #{tpu_custom_call.1} parent=27 // pred_check
          %p235 = pneg %p78
        $region34: #{tpu_custom_call.1} parent=27 // pred_check_branch
          %237 = sbr.rel (%p235) target = $region36
        $region35: #{tpu_custom_call.1} parent=27 // pred_region
          %s238 = sand.u32 %s18, 1
          %s239 = scalar_lea.sflag [#allocation7], %s238
          %s240 = sand.u32 %s68, 1
          %s241 = smul.addr %s240, 1024
          %s242 = scalar_lea.vmem [#allocation6], %s241
          %s243 = smul.u32 64, %s26
          %s245 = ssub.s32 16384, 16384
          %246 = vsyncadd %s239, %s245
          %s247 = smul.addr %s243, 4
          %s248 = smul.addr %s247, 64
          %s249 = scalar_lea.hbm %s1, %s248
          %s250 = sshll.u32 %s242, 4
          %s251 = int_to_ptr.vmem [resolvable:$true] %s250
          %256 = dma.hbm_to_vmem [thread:$0]  %s249, 16384, %s251, %s239, 256, 256, 16
        $region36: #{tpu_custom_call.1} parent=27 // pred_fallthru
          _
      $region28: #{tpu_custom_call.1} parent=5 // pred_fallthru
        _
      %p257 = scmp.le.s32.totalorder 1, %s18
      %p258 = scmp.lt.s32.totalorder %s18, 3
      %p259 = pnand %p257, %p258
      %p260 = pneg %p259
      // Predicated region
      $region37: #{tpu_custom_call.1} parent=5 // pred_check
        _
      $region38: #{tpu_custom_call.1} parent=5 // pred_check_branch
        %262 = sbr.rel (%p259) target = $region40
      $region39: #{tpu_custom_call.1} parent=5 // pred_region
        %s263 = ssub.s32 %s18, 1
        %s264 = sand.u32 %s45, 1
        %s265 = scalar_lea.sflag [#allocation4], %s264
        %s266 = sand.u32 %s45, 1
        %s267 = smul.addr %s266, 32
        %s268 = scalar_lea.vmem [#allocation3], %s267
        // Predicated region
        $region41: #{tpu_custom_call.1} parent=39 // pred_check
          %p269 = pneg %p58
        $region42: #{tpu_custom_call.1} parent=39 // pred_check_branch
          %271 = sbr.rel (%p269) target = $region44
        $region43: #{tpu_custom_call.1} parent=39 // pred_region
          %272 = dma.done %s265, 512
        $region44: #{tpu_custom_call.1} parent=39 // pred_fallthru
          _
        %s273 = sand.u32 %s23, 1
        %s274 = scalar_lea.sflag [#allocation7], %s273
        %s275 = sand.u32 %s71, 1
        %s276 = smul.addr %s275, 1024
        %s277 = scalar_lea.vmem [#allocation6], %s276
        // Predicated region
        $region45: #{tpu_custom_call.1} parent=39 // pred_check
          %p278 = pneg %p84
        $region46: #{tpu_custom_call.1} parent=39 // pred_check_branch
          %280 = sbr.rel (%p278) target = $region48
        $region47: #{tpu_custom_call.1} parent=39 // pred_region
          %281 = dma.done %s274, 16384
        $region48: #{tpu_custom_call.1} parent=39 // pred_fallthru
          _
        // Predicated region
        $region49: #{tpu_custom_call.1} parent=39 // pred_check
          %p282 = pneg %p126
        $region50: #{tpu_custom_call.1} parent=39 // pred_check_branch
          %284 = sbr.rel (%p282) target = $region52
        $region51: #{tpu_custom_call.1} parent=39 // pred_region
          %285 = dma.done [#allocation7], 4096
        $region52: #{tpu_custom_call.1} parent=39 // pred_fallthru
          _
        %s286 = sand.u32 %s45, 1
        %s287 = scalar_lea.sflag [#allocation4], %s286
        %s288 = sand.u32 %s45, 1
        %s289 = smul.addr %s288, 32
        %s290 = scalar_lea.vmem [#allocation3], %s289
        %p291 = pneg %p58
        %p292 = pneg %p55
        %s293 = sand.u32 %s23, 1
        %s294 = scalar_lea.sflag [#allocation7], %s293
        %s295 = sand.u32 %s71, 1
        %s296 = smul.addr %s295, 1024
        %s297 = scalar_lea.vmem [#allocation6], %s296
        %p298 = pneg %p84
        %p299 = pneg %p81
        %p300 = pneg %p105
        %p301 = pneg %p102
        %p302 = pneg %p126
        %p303 = pneg %p123
        %p304 = pneg %p147
        %p305 = pneg %p144
        %p306 = pneg %p173
        %p307 = pneg %p170
        %s308 = smul.u32 2, %s27
        %s309 = smul.u32 4, %s28
        %s310 = smul.u32 64, %s28
        %s311 = smul.u32 2, %s27
        %p313 = scmp.eq.s32.totalorder %s28, 0
        // Predicated region
        $region53: #{tpu_custom_call.1} parent=39 // pred_check
          %p314 = pneg %p313
        $region54: #{tpu_custom_call.1} parent=39 // pred_check_branch
          %316 = sbr.rel (%p314) target = $region56
        $region55: #{tpu_custom_call.1} parent=39 // pred_region
          %317 = vst [vmem:[#allocation2] sm:$0xff] 0.0
          %318 = vst [vmem:[#allocation2 + $0x8] sm:$0xff] 0.0
          %319 = vst [vmem:[#allocation2 + $0x10] sm:$0xff] 0.0
          %320 = vst [vmem:[#allocation2 + $0x18] sm:$0xff] 0.0
          %321 = vst [vmem:[#allocation2 + $0x20] sm:$0xff] 0.0
          %322 = vst [vmem:[#allocation2 + $0x28] sm:$0xff] 0.0
          %323 = vst [vmem:[#allocation2 + $0x30] sm:$0xff] 0.0
          %324 = vst [vmem:[#allocation2 + $0x38] sm:$0xff] 0.0
        $region56: #{tpu_custom_call.1} parent=39 // pred_fallthru
          _
        %v325 = vld [vmem:[#allocation2] sm:$0xff]
        %v326 = vld [vmem:[#allocation2 + $0x8] sm:$0xff]
        %v327 = vld [vmem:[#allocation2 + $0x10] sm:$0xff]
        %v328 = vld [vmem:[#allocation2 + $0x18] sm:$0xff]
        %v329 = vld [vmem:[#allocation2 + $0x20] sm:$0xff]
        %v330 = vld [vmem:[#allocation2 + $0x28] sm:$0xff]
        %v331 = vld [vmem:[#allocation2 + $0x30] sm:$0xff]
        %v332 = vld [vmem:[#allocation2 + $0x38] sm:$0xff]
        %v333 = vld [vmem:[%s268] sm:$0xff]
        %v334 = vld [vmem:[%s268 + $0x8] sm:$0xff]
        %v335 = vld [vmem:[%s268 + $0x10] sm:$0xff]
        %v336 = vld [vmem:[%s268 + $0x18] sm:$0xff]
        %v337 = vld [vmem:[%s277] sm:$0xff]
        %v338 = vld [vmem:[%s277 + $0x8] sm:$0xff]
        %v339 = vld [vmem:[%s277 + $0x10] sm:$0xff]
        %v340 = vld [vmem:[%s277 + $0x18] sm:$0xff]
        %v341 = vld [vmem:[%s277 + $0x20] sm:$0xff]
        %v342 = vld [vmem:[%s277 + $0x28] sm:$0xff]
        %v343 = vld [vmem:[%s277 + $0x30] sm:$0xff]
        %v344 = vld [vmem:[%s277 + $0x38] sm:$0xff]
        %v345 = vld [vmem:[%s277 + $0x40] sm:$0xff]
        %v346 = vld [vmem:[%s277 + $0x48] sm:$0xff]
        %v347 = vld [vmem:[%s277 + $0x50] sm:$0xff]
        %v348 = vld [vmem:[%s277 + $0x58] sm:$0xff]
        %v349 = vld [vmem:[%s277 + $0x60] sm:$0xff]
        %v350 = vld [vmem:[%s277 + $0x68] sm:$0xff]
        %v351 = vld [vmem:[%s277 + $0x70] sm:$0xff]
        %v352 = vld [vmem:[%s277 + $0x78] sm:$0xff]
        %v353 = vld [vmem:[%s277 + $0x80] sm:$0xff]
        %v354 = vld [vmem:[%s277 + $0x88] sm:$0xff]
        %v355 = vld [vmem:[%s277 + $0x90] sm:$0xff]
        %v356 = vld [vmem:[%s277 + $0x98] sm:$0xff]
        %v357 = vld [vmem:[%s277 + $0xa0] sm:$0xff]
        %v358 = vld [vmem:[%s277 + $0xa8] sm:$0xff]
        %v359 = vld [vmem:[%s277 + $0xb0] sm:$0xff]
        %v360 = vld [vmem:[%s277 + $0xb8] sm:$0xff]
        %v361 = vld [vmem:[%s277 + $0xc0] sm:$0xff]
        %v362 = vld [vmem:[%s277 + $0xc8] sm:$0xff]
        %v363 = vld [vmem:[%s277 + $0xd0] sm:$0xff]
        %v364 = vld [vmem:[%s277 + $0xd8] sm:$0xff]
        %v365 = vld [vmem:[%s277 + $0xe0] sm:$0xff]
        %v366 = vld [vmem:[%s277 + $0xe8] sm:$0xff]
        %v367 = vld [vmem:[%s277 + $0xf0] sm:$0xff]
        %v368 = vld [vmem:[%s277 + $0xf8] sm:$0xff]
        %v369 = vld [vmem:[%s277 + $0x100] sm:$0xff]
        %v370 = vld [vmem:[%s277 + $0x108] sm:$0xff]
        %v371 = vld [vmem:[%s277 + $0x110] sm:$0xff]
        %v372 = vld [vmem:[%s277 + $0x118] sm:$0xff]
        %v373 = vld [vmem:[%s277 + $0x120] sm:$0xff]
        %v374 = vld [vmem:[%s277 + $0x128] sm:$0xff]
        %v375 = vld [vmem:[%s277 + $0x130] sm:$0xff]
        %v376 = vld [vmem:[%s277 + $0x138] sm:$0xff]
        %v377 = vld [vmem:[%s277 + $0x140] sm:$0xff]
        %v378 = vld [vmem:[%s277 + $0x148] sm:$0xff]
        %v379 = vld [vmem:[%s277 + $0x150] sm:$0xff]
        %v380 = vld [vmem:[%s277 + $0x158] sm:$0xff]
        %v381 = vld [vmem:[%s277 + $0x160] sm:$0xff]
        %v382 = vld [vmem:[%s277 + $0x168] sm:$0xff]
        %v383 = vld [vmem:[%s277 + $0x170] sm:$0xff]
        %v384 = vld [vmem:[%s277 + $0x178] sm:$0xff]
        %v385 = vld [vmem:[%s277 + $0x180] sm:$0xff]
        %v386 = vld [vmem:[%s277 + $0x188] sm:$0xff]
        %v387 = vld [vmem:[%s277 + $0x190] sm:$0xff]
        %v388 = vld [vmem:[%s277 + $0x198] sm:$0xff]
        %v389 = vld [vmem:[%s277 + $0x1a0] sm:$0xff]
        %v390 = vld [vmem:[%s277 + $0x1a8] sm:$0xff]
        %v391 = vld [vmem:[%s277 + $0x1b0] sm:$0xff]
        %v392 = vld [vmem:[%s277 + $0x1b8] sm:$0xff]
        %v393 = vld [vmem:[%s277 + $0x1c0] sm:$0xff]
        %v394 = vld [vmem:[%s277 + $0x1c8] sm:$0xff]
        %v395 = vld [vmem:[%s277 + $0x1d0] sm:$0xff]
        %v396 = vld [vmem:[%s277 + $0x1d8] sm:$0xff]
        %v397 = vld [vmem:[%s277 + $0x1e0] sm:$0xff]
        %v398 = vld [vmem:[%s277 + $0x1e8] sm:$0xff]
        %v399 = vld [vmem:[%s277 + $0x1f0] sm:$0xff]
        %v400 = vld [vmem:[%s277 + $0x1f8] sm:$0xff]
        %v401 = vld [vmem:[%s277 + $0x200] sm:$0xff]
        %v402 = vld [vmem:[%s277 + $0x208] sm:$0xff]
        %v403 = vld [vmem:[%s277 + $0x210] sm:$0xff]
        %v404 = vld [vmem:[%s277 + $0x218] sm:$0xff]
        %v405 = vld [vmem:[%s277 + $0x220] sm:$0xff]
        %v406 = vld [vmem:[%s277 + $0x228] sm:$0xff]
        %v407 = vld [vmem:[%s277 + $0x230] sm:$0xff]
        %v408 = vld [vmem:[%s277 + $0x238] sm:$0xff]
        %v409 = vld [vmem:[%s277 + $0x240] sm:$0xff]
        %v410 = vld [vmem:[%s277 + $0x248] sm:$0xff]
        %v411 = vld [vmem:[%s277 + $0x250] sm:$0xff]
        %v412 = vld [vmem:[%s277 + $0x258] sm:$0xff]
        %v413 = vld [vmem:[%s277 + $0x260] sm:$0xff]
        %v414 = vld [vmem:[%s277 + $0x268] sm:$0xff]
        %v415 = vld [vmem:[%s277 + $0x270] sm:$0xff]
        %v416 = vld [vmem:[%s277 + $0x278] sm:$0xff]
        %v417 = vld [vmem:[%s277 + $0x280] sm:$0xff]
        %v418 = vld [vmem:[%s277 + $0x288] sm:$0xff]
        %v419 = vld [vmem:[%s277 + $0x290] sm:$0xff]
        %v420 = vld [vmem:[%s277 + $0x298] sm:$0xff]
        %v421 = vld [vmem:[%s277 + $0x2a0] sm:$0xff]
        %v422 = vld [vmem:[%s277 + $0x2a8] sm:$0xff]
        %v423 = vld [vmem:[%s277 + $0x2b0] sm:$0xff]
        %v424 = vld [vmem:[%s277 + $0x2b8] sm:$0xff]
        %v425 = vld [vmem:[%s277 + $0x2c0] sm:$0xff]
        %v426 = vld [vmem:[%s277 + $0x2c8] sm:$0xff]
        %v427 = vld [vmem:[%s277 + $0x2d0] sm:$0xff]
        %v428 = vld [vmem:[%s277 + $0x2d8] sm:$0xff]
        %v429 = vld [vmem:[%s277 + $0x2e0] sm:$0xff]
        %v430 = vld [vmem:[%s277 + $0x2e8] sm:$0xff]
        %v431 = vld [vmem:[%s277 + $0x2f0] sm:$0xff]
        %v432 = vld [vmem:[%s277 + $0x2f8] sm:$0xff]
        %v433 = vld [vmem:[%s277 + $0x300] sm:$0xff]
        %v434 = vld [vmem:[%s277 + $0x308] sm:$0xff]
        %v435 = vld [vmem:[%s277 + $0x310] sm:$0xff]
        %v436 = vld [vmem:[%s277 + $0x318] sm:$0xff]
        %v437 = vld [vmem:[%s277 + $0x320] sm:$0xff]
        %v438 = vld [vmem:[%s277 + $0x328] sm:$0xff]
        %v439 = vld [vmem:[%s277 + $0x330] sm:$0xff]
        %v440 = vld [vmem:[%s277 + $0x338] sm:$0xff]
        %v441 = vld [vmem:[%s277 + $0x340] sm:$0xff]
        %v442 = vld [vmem:[%s277 + $0x348] sm:$0xff]
        %v443 = vld [vmem:[%s277 + $0x350] sm:$0xff]
        %v444 = vld [vmem:[%s277 + $0x358] sm:$0xff]
        %v445 = vld [vmem:[%s277 + $0x360] sm:$0xff]
        %v446 = vld [vmem:[%s277 + $0x368] sm:$0xff]
        %v447 = vld [vmem:[%s277 + $0x370] sm:$0xff]
        %v448 = vld [vmem:[%s277 + $0x378] sm:$0xff]
        %v449 = vld [vmem:[%s277 + $0x380] sm:$0xff]
        %v450 = vld [vmem:[%s277 + $0x388] sm:$0xff]
        %v451 = vld [vmem:[%s277 + $0x390] sm:$0xff]
        %v452 = vld [vmem:[%s277 + $0x398] sm:$0xff]
        %v453 = vld [vmem:[%s277 + $0x3a0] sm:$0xff]
        %v454 = vld [vmem:[%s277 + $0x3a8] sm:$0xff]
        %v455 = vld [vmem:[%s277 + $0x3b0] sm:$0xff]
        %v456 = vld [vmem:[%s277 + $0x3b8] sm:$0xff]
        %v457 = vld [vmem:[%s277 + $0x3c0] sm:$0xff]
        %v458 = vld [vmem:[%s277 + $0x3c8] sm:$0xff]
        %v459 = vld [vmem:[%s277 + $0x3d0] sm:$0xff]
        %v460 = vld [vmem:[%s277 + $0x3d8] sm:$0xff]
        %v461 = vld [vmem:[%s277 + $0x3e0] sm:$0xff]
        %v462 = vld [vmem:[%s277 + $0x3e8] sm:$0xff]
        %v463 = vld [vmem:[%s277 + $0x3f0] sm:$0xff]
        %v464 = vld [vmem:[%s277 + $0x3f8] sm:$0xff]
        %v469 = vunpack.c.l.b16 %v333
        %v470 = vunpack.c.h.b16 %v333
        %v471 = vunpack.c.l.b16 %v334
        %v472 = vunpack.c.h.b16 %v334
        %v473 = vunpack.c.l.b16 %v335
        %v474 = vunpack.c.h.b16 %v335
        %v475 = vunpack.c.l.b16 %v336
        %v476 = vunpack.c.h.b16 %v336
        %v477 = vpack.c.b16 %v473, %v469
        %v478 = vpack.c.b16 %v474, %v470
        %v479 = vpack.c.b16 %v475, %v471
        %v480 = vpack.c.b16 %v476, %v472
        %v613 = vunpack.c.l.b16 %v337
        %v614 = vunpack.c.h.b16 %v337
        %v615 = vunpack.c.l.b16 %v338
        %v616 = vunpack.c.h.b16 %v338
        %v617 = vunpack.c.l.b16 %v339
        %v618 = vunpack.c.h.b16 %v339
        %v619 = vunpack.c.l.b16 %v340
        %v620 = vunpack.c.h.b16 %v340
        %v621 = vunpack.c.l.b16 %v341
        %v622 = vunpack.c.h.b16 %v341
        %v623 = vunpack.c.l.b16 %v342
        %v624 = vunpack.c.h.b16 %v342
        %v625 = vunpack.c.l.b16 %v343
        %v626 = vunpack.c.h.b16 %v343
        %v627 = vunpack.c.l.b16 %v344
        %v628 = vunpack.c.h.b16 %v344
        %v629 = vunpack.c.l.b16 %v345
        %v630 = vunpack.c.h.b16 %v345
        %v631 = vunpack.c.l.b16 %v346
        %v632 = vunpack.c.h.b16 %v346
        %v633 = vunpack.c.l.b16 %v347
        %v634 = vunpack.c.h.b16 %v347
        %v635 = vunpack.c.l.b16 %v348
        %v636 = vunpack.c.h.b16 %v348
        %v637 = vunpack.c.l.b16 %v349
        %v638 = vunpack.c.h.b16 %v349
        %v639 = vunpack.c.l.b16 %v350
        %v640 = vunpack.c.h.b16 %v350
        %v641 = vunpack.c.l.b16 %v351
        %v642 = vunpack.c.h.b16 %v351
        %v643 = vunpack.c.l.b16 %v352
        %v644 = vunpack.c.h.b16 %v352
        %v645 = vunpack.c.l.b16 %v353
        %v646 = vunpack.c.h.b16 %v353
        %v647 = vunpack.c.l.b16 %v354
        %v648 = vunpack.c.h.b16 %v354
        %v649 = vunpack.c.l.b16 %v355
        %v650 = vunpack.c.h.b16 %v355
        %v651 = vunpack.c.l.b16 %v356
        %v652 = vunpack.c.h.b16 %v356
        %v653 = vunpack.c.l.b16 %v357
        %v654 = vunpack.c.h.b16 %v357
        %v655 = vunpack.c.l.b16 %v358
        %v656 = vunpack.c.h.b16 %v358
        %v657 = vunpack.c.l.b16 %v359
        %v658 = vunpack.c.h.b16 %v359
        %v659 = vunpack.c.l.b16 %v360
        %v660 = vunpack.c.h.b16 %v360
        %v661 = vunpack.c.l.b16 %v361
        %v662 = vunpack.c.h.b16 %v361
        %v663 = vunpack.c.l.b16 %v362
        %v664 = vunpack.c.h.b16 %v362
        %v665 = vunpack.c.l.b16 %v363
        %v666 = vunpack.c.h.b16 %v363
        %v667 = vunpack.c.l.b16 %v364
        %v668 = vunpack.c.h.b16 %v364
        %v669 = vunpack.c.l.b16 %v365
        %v670 = vunpack.c.h.b16 %v365
        %v671 = vunpack.c.l.b16 %v366
        %v672 = vunpack.c.h.b16 %v366
        %v673 = vunpack.c.l.b16 %v367
        %v674 = vunpack.c.h.b16 %v367
        %v675 = vunpack.c.l.b16 %v368
        %v676 = vunpack.c.h.b16 %v368
        %v677 = vunpack.c.l.b16 %v369
        %v678 = vunpack.c.h.b16 %v369
        %v679 = vunpack.c.l.b16 %v370
        %v680 = vunpack.c.h.b16 %v370
        %v681 = vunpack.c.l.b16 %v371
        %v682 = vunpack.c.h.b16 %v371
        %v683 = vunpack.c.l.b16 %v372
        %v684 = vunpack.c.h.b16 %v372
        %v685 = vunpack.c.l.b16 %v373
        %v686 = vunpack.c.h.b16 %v373
        %v687 = vunpack.c.l.b16 %v374
        %v688 = vunpack.c.h.b16 %v374
        %v689 = vunpack.c.l.b16 %v375
        %v690 = vunpack.c.h.b16 %v375
        %v691 = vunpack.c.l.b16 %v376
        %v692 = vunpack.c.h.b16 %v376
        %v693 = vunpack.c.l.b16 %v377
        %v694 = vunpack.c.h.b16 %v377
        %v695 = vunpack.c.l.b16 %v378
        %v696 = vunpack.c.h.b16 %v378
        %v697 = vunpack.c.l.b16 %v379
        %v698 = vunpack.c.h.b16 %v379
        %v699 = vunpack.c.l.b16 %v380
        %v700 = vunpack.c.h.b16 %v380
        %v701 = vunpack.c.l.b16 %v381
        %v702 = vunpack.c.h.b16 %v381
        %v703 = vunpack.c.l.b16 %v382
        %v704 = vunpack.c.h.b16 %v382
        %v705 = vunpack.c.l.b16 %v383
        %v706 = vunpack.c.h.b16 %v383
        %v707 = vunpack.c.l.b16 %v384
        %v708 = vunpack.c.h.b16 %v384
        %v709 = vunpack.c.l.b16 %v385
        %v710 = vunpack.c.h.b16 %v385
        %v711 = vunpack.c.l.b16 %v386
        %v712 = vunpack.c.h.b16 %v386
        %v713 = vunpack.c.l.b16 %v387
        %v714 = vunpack.c.h.b16 %v387
        %v715 = vunpack.c.l.b16 %v388
        %v716 = vunpack.c.h.b16 %v388
        %v717 = vunpack.c.l.b16 %v389
        %v718 = vunpack.c.h.b16 %v389
        %v719 = vunpack.c.l.b16 %v390
        %v720 = vunpack.c.h.b16 %v390
        %v721 = vunpack.c.l.b16 %v391
        %v722 = vunpack.c.h.b16 %v391
        %v723 = vunpack.c.l.b16 %v392
        %v724 = vunpack.c.h.b16 %v392
        %v725 = vunpack.c.l.b16 %v393
        %v726 = vunpack.c.h.b16 %v393
        %v727 = vunpack.c.l.b16 %v394
        %v728 = vunpack.c.h.b16 %v394
        %v729 = vunpack.c.l.b16 %v395
        %v730 = vunpack.c.h.b16 %v395
        %v731 = vunpack.c.l.b16 %v396
        %v732 = vunpack.c.h.b16 %v396
        %v733 = vunpack.c.l.b16 %v397
        %v734 = vunpack.c.h.b16 %v397
        %v735 = vunpack.c.l.b16 %v398
        %v736 = vunpack.c.h.b16 %v398
        %v737 = vunpack.c.l.b16 %v399
        %v738 = vunpack.c.h.b16 %v399
        %v739 = vunpack.c.l.b16 %v400
        %v740 = vunpack.c.h.b16 %v400
        %v741 = vunpack.c.l.b16 %v401
        %v742 = vunpack.c.h.b16 %v401
        %v743 = vunpack.c.l.b16 %v402
        %v744 = vunpack.c.h.b16 %v402
        %v745 = vunpack.c.l.b16 %v403
        %v746 = vunpack.c.h.b16 %v403
        %v747 = vunpack.c.l.b16 %v404
        %v748 = vunpack.c.h.b16 %v404
        %v749 = vunpack.c.l.b16 %v405
        %v750 = vunpack.c.h.b16 %v405
        %v751 = vunpack.c.l.b16 %v406
        %v752 = vunpack.c.h.b16 %v406
        %v753 = vunpack.c.l.b16 %v407
        %v754 = vunpack.c.h.b16 %v407
        %v755 = vunpack.c.l.b16 %v408
        %v756 = vunpack.c.h.b16 %v408
        %v757 = vunpack.c.l.b16 %v409
        %v758 = vunpack.c.h.b16 %v409
        %v759 = vunpack.c.l.b16 %v410
        %v760 = vunpack.c.h.b16 %v410
        %v761 = vunpack.c.l.b16 %v411
        %v762 = vunpack.c.h.b16 %v411
        %v763 = vunpack.c.l.b16 %v412
        %v764 = vunpack.c.h.b16 %v412
        %v765 = vunpack.c.l.b16 %v413
        %v766 = vunpack.c.h.b16 %v413
        %v767 = vunpack.c.l.b16 %v414
        %v768 = vunpack.c.h.b16 %v414
        %v769 = vunpack.c.l.b16 %v415
        %v770 = vunpack.c.h.b16 %v415
        %v771 = vunpack.c.l.b16 %v416
        %v772 = vunpack.c.h.b16 %v416
        %v773 = vunpack.c.l.b16 %v417
        %v774 = vunpack.c.h.b16 %v417
        %v775 = vunpack.c.l.b16 %v418
        %v776 = vunpack.c.h.b16 %v418
        %v777 = vunpack.c.l.b16 %v419
        %v778 = vunpack.c.h.b16 %v419
        %v779 = vunpack.c.l.b16 %v420
        %v780 = vunpack.c.h.b16 %v420
        %v781 = vunpack.c.l.b16 %v421
        %v782 = vunpack.c.h.b16 %v421
        %v783 = vunpack.c.l.b16 %v422
        %v784 = vunpack.c.h.b16 %v422
        %v785 = vunpack.c.l.b16 %v423
        %v786 = vunpack.c.h.b16 %v423
        %v787 = vunpack.c.l.b16 %v424
        %v788 = vunpack.c.h.b16 %v424
        %v789 = vunpack.c.l.b16 %v425
        %v790 = vunpack.c.h.b16 %v425
        %v791 = vunpack.c.l.b16 %v426
        %v792 = vunpack.c.h.b16 %v426
        %v793 = vunpack.c.l.b16 %v427
        %v794 = vunpack.c.h.b16 %v427
        %v795 = vunpack.c.l.b16 %v428
        %v796 = vunpack.c.h.b16 %v428
        %v797 = vunpack.c.l.b16 %v429
        %v798 = vunpack.c.h.b16 %v429
        %v799 = vunpack.c.l.b16 %v430
        %v800 = vunpack.c.h.b16 %v430
        %v801 = vunpack.c.l.b16 %v431
        %v802 = vunpack.c.h.b16 %v431
        %v803 = vunpack.c.l.b16 %v432
        %v804 = vunpack.c.h.b16 %v432
        %v805 = vunpack.c.l.b16 %v433
        %v806 = vunpack.c.h.b16 %v433
        %v807 = vunpack.c.l.b16 %v434
        %v808 = vunpack.c.h.b16 %v434
        %v809 = vunpack.c.l.b16 %v435
        %v810 = vunpack.c.h.b16 %v435
        %v811 = vunpack.c.l.b16 %v436
        %v812 = vunpack.c.h.b16 %v436
        %v813 = vunpack.c.l.b16 %v437
        %v814 = vunpack.c.h.b16 %v437
        %v815 = vunpack.c.l.b16 %v438
        %v816 = vunpack.c.h.b16 %v438
        %v817 = vunpack.c.l.b16 %v439
        %v818 = vunpack.c.h.b16 %v439
        %v819 = vunpack.c.l.b16 %v440
        %v820 = vunpack.c.h.b16 %v440
        %v821 = vunpack.c.l.b16 %v441
        %v822 = vunpack.c.h.b16 %v441
        %v823 = vunpack.c.l.b16 %v442
        %v824 = vunpack.c.h.b16 %v442
        %v825 = vunpack.c.l.b16 %v443
        %v826 = vunpack.c.h.b16 %v443
        %v827 = vunpack.c.l.b16 %v444
        %v828 = vunpack.c.h.b16 %v444
        %v829 = vunpack.c.l.b16 %v445
        %v830 = vunpack.c.h.b16 %v445
        %v831 = vunpack.c.l.b16 %v446
        %v832 = vunpack.c.h.b16 %v446
        %v833 = vunpack.c.l.b16 %v447
        %v834 = vunpack.c.h.b16 %v447
        %v835 = vunpack.c.l.b16 %v448
        %v836 = vunpack.c.h.b16 %v448
        %v837 = vunpack.c.l.b16 %v449
        %v838 = vunpack.c.h.b16 %v449
        %v839 = vunpack.c.l.b16 %v450
        %v840 = vunpack.c.h.b16 %v450
        %v841 = vunpack.c.l.b16 %v451
        %v842 = vunpack.c.h.b16 %v451
        %v843 = vunpack.c.l.b16 %v452
        %v844 = vunpack.c.h.b16 %v452
        %v845 = vunpack.c.l.b16 %v453
        %v846 = vunpack.c.h.b16 %v453
        %v847 = vunpack.c.l.b16 %v454
        %v848 = vunpack.c.h.b16 %v454
        %v849 = vunpack.c.l.b16 %v455
        %v850 = vunpack.c.h.b16 %v455
        %v851 = vunpack.c.l.b16 %v456
        %v852 = vunpack.c.h.b16 %v456
        %v853 = vunpack.c.l.b16 %v457
        %v854 = vunpack.c.h.b16 %v457
        %v855 = vunpack.c.l.b16 %v458
        %v856 = vunpack.c.h.b16 %v458
        %v857 = vunpack.c.l.b16 %v459
        %v858 = vunpack.c.h.b16 %v459
        %v859 = vunpack.c.l.b16 %v460
        %v860 = vunpack.c.h.b16 %v460
        %v861 = vunpack.c.l.b16 %v461
        %v862 = vunpack.c.h.b16 %v461
        %v863 = vunpack.c.l.b16 %v462
        %v864 = vunpack.c.h.b16 %v462
        %v865 = vunpack.c.l.b16 %v463
        %v866 = vunpack.c.h.b16 %v463
        %v867 = vunpack.c.l.b16 %v464
        %v868 = vunpack.c.h.b16 %v464
        %v869 = vpack.c.b16 %v617, %v613
        %v870 = vpack.c.b16 %v618, %v614
        %v871 = vpack.c.b16 %v619, %v615
        %v872 = vpack.c.b16 %v620, %v616
        %v873 = vpack.c.b16 %v625, %v621
        %v874 = vpack.c.b16 %v626, %v622
        %v875 = vpack.c.b16 %v627, %v623
        %v876 = vpack.c.b16 %v628, %v624
        %v877 = vpack.c.b16 %v633, %v629
        %v878 = vpack.c.b16 %v634, %v630
        %v879 = vpack.c.b16 %v635, %v631
        %v880 = vpack.c.b16 %v636, %v632
        %v881 = vpack.c.b16 %v641, %v637
        %v882 = vpack.c.b16 %v642, %v638
        %v883 = vpack.c.b16 %v643, %v639
        %v884 = vpack.c.b16 %v644, %v640
        %v885 = vpack.c.b16 %v649, %v645
        %v886 = vpack.c.b16 %v650, %v646
        %v887 = vpack.c.b16 %v651, %v647
        %v888 = vpack.c.b16 %v652, %v648
        %v889 = vpack.c.b16 %v657, %v653
        %v890 = vpack.c.b16 %v658, %v654
        %v891 = vpack.c.b16 %v659, %v655
        %v892 = vpack.c.b16 %v660, %v656
        %v893 = vpack.c.b16 %v665, %v661
        %v894 = vpack.c.b16 %v666, %v662
        %v895 = vpack.c.b16 %v667, %v663
        %v896 = vpack.c.b16 %v668, %v664
        %v897 = vpack.c.b16 %v673, %v669
        %v898 = vpack.c.b16 %v674, %v670
        %v899 = vpack.c.b16 %v675, %v671
        %v900 = vpack.c.b16 %v676, %v672
        %v901 = vpack.c.b16 %v681, %v677
        %v902 = vpack.c.b16 %v682, %v678
        %v903 = vpack.c.b16 %v683, %v679
        %v904 = vpack.c.b16 %v684, %v680
        %v905 = vpack.c.b16 %v689, %v685
        %v906 = vpack.c.b16 %v690, %v686
        %v907 = vpack.c.b16 %v691, %v687
        %v908 = vpack.c.b16 %v692, %v688
        %v909 = vpack.c.b16 %v697, %v693
        %v910 = vpack.c.b16 %v698, %v694
        %v911 = vpack.c.b16 %v699, %v695
        %v912 = vpack.c.b16 %v700, %v696
        %v913 = vpack.c.b16 %v705, %v701
        %v914 = vpack.c.b16 %v706, %v702
        %v915 = vpack.c.b16 %v707, %v703
        %v916 = vpack.c.b16 %v708, %v704
        %v917 = vpack.c.b16 %v713, %v709
        %v918 = vpack.c.b16 %v714, %v710
        %v919 = vpack.c.b16 %v715, %v711
        %v920 = vpack.c.b16 %v716, %v712
        %v921 = vpack.c.b16 %v721, %v717
        %v922 = vpack.c.b16 %v722, %v718
        %v923 = vpack.c.b16 %v723, %v719
        %v924 = vpack.c.b16 %v724, %v720
        %v925 = vpack.c.b16 %v729, %v725
        %v926 = vpack.c.b16 %v730, %v726
        %v927 = vpack.c.b16 %v731, %v727
        %v928 = vpack.c.b16 %v732, %v728
        %v929 = vpack.c.b16 %v737, %v733
        %v930 = vpack.c.b16 %v738, %v734
        %v931 = vpack.c.b16 %v739, %v735
        %v932 = vpack.c.b16 %v740, %v736
        %v933 = vpack.c.b16 %v745, %v741
        %v934 = vpack.c.b16 %v746, %v742
        %v935 = vpack.c.b16 %v747, %v743
        %v936 = vpack.c.b16 %v748, %v744
        %v937 = vpack.c.b16 %v753, %v749
        %v938 = vpack.c.b16 %v754, %v750
        %v939 = vpack.c.b16 %v755, %v751
        %v940 = vpack.c.b16 %v756, %v752
        %v941 = vpack.c.b16 %v761, %v757
        %v942 = vpack.c.b16 %v762, %v758
        %v943 = vpack.c.b16 %v763, %v759
        %v944 = vpack.c.b16 %v764, %v760
        %v945 = vpack.c.b16 %v769, %v765
        %v946 = vpack.c.b16 %v770, %v766
        %v947 = vpack.c.b16 %v771, %v767
        %v948 = vpack.c.b16 %v772, %v768
        %v949 = vpack.c.b16 %v777, %v773
        %v950 = vpack.c.b16 %v778, %v774
        %v951 = vpack.c.b16 %v779, %v775
        %v952 = vpack.c.b16 %v780, %v776
        %v953 = vpack.c.b16 %v785, %v781
        %v954 = vpack.c.b16 %v786, %v782
        %v955 = vpack.c.b16 %v787, %v783
        %v956 = vpack.c.b16 %v788, %v784
        %v957 = vpack.c.b16 %v793, %v789
        %v958 = vpack.c.b16 %v794, %v790
        %v959 = vpack.c.b16 %v795, %v791
        %v960 = vpack.c.b16 %v796, %v792
        %v961 = vpack.c.b16 %v801, %v797
        %v962 = vpack.c.b16 %v802, %v798
        %v963 = vpack.c.b16 %v803, %v799
        %v964 = vpack.c.b16 %v804, %v800
        %v965 = vpack.c.b16 %v809, %v805
        %v966 = vpack.c.b16 %v810, %v806
        %v967 = vpack.c.b16 %v811, %v807
        %v968 = vpack.c.b16 %v812, %v808
        %v969 = vpack.c.b16 %v817, %v813
        %v970 = vpack.c.b16 %v818, %v814
        %v971 = vpack.c.b16 %v819, %v815
        %v972 = vpack.c.b16 %v820, %v816
        %v973 = vpack.c.b16 %v825, %v821
        %v974 = vpack.c.b16 %v826, %v822
        %v975 = vpack.c.b16 %v827, %v823
        %v976 = vpack.c.b16 %v828, %v824
        %v977 = vpack.c.b16 %v833, %v829
        %v978 = vpack.c.b16 %v834, %v830
        %v979 = vpack.c.b16 %v835, %v831
        %v980 = vpack.c.b16 %v836, %v832
        %v981 = vpack.c.b16 %v841, %v837
        %v982 = vpack.c.b16 %v842, %v838
        %v983 = vpack.c.b16 %v843, %v839
        %v984 = vpack.c.b16 %v844, %v840
        %v985 = vpack.c.b16 %v849, %v845
        %v986 = vpack.c.b16 %v850, %v846
        %v987 = vpack.c.b16 %v851, %v847
        %v988 = vpack.c.b16 %v852, %v848
        %v989 = vpack.c.b16 %v857, %v853
        %v990 = vpack.c.b16 %v858, %v854
        %v991 = vpack.c.b16 %v859, %v855
        %v992 = vpack.c.b16 %v860, %v856
        %v993 = vpack.c.b16 %v865, %v861
        %v994 = vpack.c.b16 %v866, %v862
        %v995 = vpack.c.b16 %v867, %v863
        %v996 = vpack.c.b16 %v868, %v864
        %1125 = vmatprep.subr.bf16.mxu0 %v870
        %1126 = vmatpush1.bf16.msra.mxu0 %v869
        %1127 = vmatprep.subr.bf16.mxu0 %v874
        %1128 = vmatpush1.bf16.msra.mxu0 %v873
        %1129 = vmatprep.subr.bf16.mxu0 %v878
        %1130 = vmatpush1.bf16.msra.mxu0 %v877
        %1131 = vmatprep.subr.bf16.mxu0 %v882
        %1132 = vmatpush1.bf16.msra.mxu0 %v881
        %1133 = vmatprep.subr.bf16.mxu0 %v886
        %1134 = vmatpush1.bf16.msra.mxu0 %v885
        %1135 = vmatprep.subr.bf16.mxu0 %v890
        %1136 = vmatpush1.bf16.msra.mxu0 %v889
        %1137 = vmatprep.subr.bf16.mxu0 %v894
        %1138 = vmatpush1.bf16.msra.mxu0 %v893
        %1139 = vmatprep.subr.bf16.mxu0 %v898
        %1140 = vmatpush1.bf16.msra.mxu0 %v897
        %1141 = vmatprep.subr.bf16.mxu0 %v902
        %1142 = vmatpush1.bf16.msra.mxu0 %v901
        %1143 = vmatprep.subr.bf16.mxu0 %v906
        %1144 = vmatpush1.bf16.msra.mxu0 %v905
        %1145 = vmatprep.subr.bf16.mxu0 %v910
        %1146 = vmatpush1.bf16.msra.mxu0 %v909
        %1147 = vmatprep.subr.bf16.mxu0 %v914
        %1148 = vmatpush1.bf16.msra.mxu0 %v913
        %1149 = vmatprep.subr.bf16.mxu0 %v918
        %1150 = vmatpush1.bf16.msra.mxu0 %v917
        %1151 = vmatprep.subr.bf16.mxu0 %v922
        %1152 = vmatpush1.bf16.msra.mxu0 %v921
        %1153 = vmatprep.subr.bf16.mxu0 %v926
        %1154 = vmatpush1.bf16.msra.mxu0 %v925
        %1155 = vmatprep.subr.bf16.mxu0 %v930
        %1156 = vmatpush1.bf16.msra.mxu0 %v929
        %1157 = vmatprep.mubr.bf16.mxu0 %v478
        %1158 = vmatmul.mubr.bf16.gmra.mrb[0].mxu0 %v477
        %v1159 = vpop.f32.mrb[0].mxu0
        %v1160 = vadd.f32 0.0, %v1159
        %v1161 = vpop.f32.mrb[0].mxu0
        %v1162 = vadd.f32 0.0, %v1161
        %v1163 = vpop.f32.mrb[0].mxu0
        %v1164 = vadd.f32 0.0, %v1163
        %v1165 = vpop.f32.mrb[0].mxu0
        %v1166 = vadd.f32 0.0, %v1165
        %1167 = vdwg.mxu0
        %1168 = vmatprep.subr.bf16.mxu0 %v934
        %1169 = vmatpush1.bf16.msra.mxu0 %v933
        %1170 = vmatprep.subr.bf16.mxu0 %v938
        %1171 = vmatpush1.bf16.msra.mxu0 %v937
        %1172 = vmatprep.subr.bf16.mxu0 %v942
        %1173 = vmatpush1.bf16.msra.mxu0 %v941
        %1174 = vmatprep.subr.bf16.mxu0 %v946
        %1175 = vmatpush1.bf16.msra.mxu0 %v945
        %1176 = vmatprep.subr.bf16.mxu0 %v950
        %1177 = vmatpush1.bf16.msra.mxu0 %v949
        %1178 = vmatprep.subr.bf16.mxu0 %v954
        %1179 = vmatpush1.bf16.msra.mxu0 %v953
        %1180 = vmatprep.subr.bf16.mxu0 %v958
        %1181 = vmatpush1.bf16.msra.mxu0 %v957
        %1182 = vmatprep.subr.bf16.mxu0 %v962
        %1183 = vmatpush1.bf16.msra.mxu0 %v961
        %1184 = vmatprep.subr.bf16.mxu0 %v966
        %1185 = vmatpush1.bf16.msra.mxu0 %v965
        %1186 = vmatprep.subr.bf16.mxu0 %v970
        %1187 = vmatpush1.bf16.msra.mxu0 %v969
        %1188 = vmatprep.subr.bf16.mxu0 %v974
        %1189 = vmatpush1.bf16.msra.mxu0 %v973
        %1190 = vmatprep.subr.bf16.mxu0 %v978
        %1191 = vmatpush1.bf16.msra.mxu0 %v977
        %1192 = vmatprep.subr.bf16.mxu0 %v982
        %1193 = vmatpush1.bf16.msra.mxu0 %v981
        %1194 = vmatprep.subr.bf16.mxu0 %v986
        %1195 = vmatpush1.bf16.msra.mxu0 %v985
        %1196 = vmatprep.subr.bf16.mxu0 %v990
        %1197 = vmatpush1.bf16.msra.mxu0 %v989
        %1198 = vmatprep.subr.bf16.mxu0 %v994
        %1199 = vmatpush1.bf16.msra.mxu0 %v993
        %1200 = vmatprep.mubr.bf16.mxu0 %v480
        %1201 = vmatmul.mubr.bf16.gmra.mrb[0].mxu0 %v479
        %v1202 = vpop.f32.mrb[0].mxu0
        %v1203 = vadd.f32 %v1160, %v1202
        %v1204 = vpop.f32.mrb[0].mxu0
        %v1205 = vadd.f32 %v1162, %v1204
        %v1206 = vpop.f32.mrb[0].mxu0
        %v1207 = vadd.f32 %v1164, %v1206
        %v1208 = vpop.f32.mrb[0].mxu0
        %v1209 = vadd.f32 %v1166, %v1208
        %1210 = vdwg.mxu0
        %1211 = vmatprep.subr.bf16.mxu0 %v872
        %1212 = vmatpush1.bf16.msra.mxu0 %v871
        %1213 = vmatprep.subr.bf16.mxu0 %v876
        %1214 = vmatpush1.bf16.msra.mxu0 %v875
        %1215 = vmatprep.subr.bf16.mxu0 %v880
        %1216 = vmatpush1.bf16.msra.mxu0 %v879
        %1217 = vmatprep.subr.bf16.mxu0 %v884
        %1218 = vmatpush1.bf16.msra.mxu0 %v883
        %1219 = vmatprep.subr.bf16.mxu0 %v888
        %1220 = vmatpush1.bf16.msra.mxu0 %v887
        %1221 = vmatprep.subr.bf16.mxu0 %v892
        %1222 = vmatpush1.bf16.msra.mxu0 %v891
        %1223 = vmatprep.subr.bf16.mxu0 %v896
        %1224 = vmatpush1.bf16.msra.mxu0 %v895
        %1225 = vmatprep.subr.bf16.mxu0 %v900
        %1226 = vmatpush1.bf16.msra.mxu0 %v899
        %1227 = vmatprep.subr.bf16.mxu0 %v904
        %1228 = vmatpush1.bf16.msra.mxu0 %v903
        %1229 = vmatprep.subr.bf16.mxu0 %v908
        %1230 = vmatpush1.bf16.msra.mxu0 %v907
        %1231 = vmatprep.subr.bf16.mxu0 %v912
        %1232 = vmatpush1.bf16.msra.mxu0 %v911
        %1233 = vmatprep.subr.bf16.mxu0 %v916
        %1234 = vmatpush1.bf16.msra.mxu0 %v915
        %1235 = vmatprep.subr.bf16.mxu0 %v920
        %1236 = vmatpush1.bf16.msra.mxu0 %v919
        %1237 = vmatprep.subr.bf16.mxu0 %v924
        %1238 = vmatpush1.bf16.msra.mxu0 %v923
        %1239 = vmatprep.subr.bf16.mxu0 %v928
        %1240 = vmatpush1.bf16.msra.mxu0 %v927
        %1241 = vmatprep.subr.bf16.mxu0 %v932
        %1242 = vmatpush1.bf16.msra.mxu0 %v931
        %1243 = vmatprep.mubr.bf16.mxu0 %v478
        %1244 = vmatmul.mubr.bf16.gmra.mrb[0].mxu0 %v477
        %v1245 = vpop.f32.mrb[0].mxu0
        %v1246 = vadd.f32 0.0, %v1245
        %v1247 = vpop.f32.mrb[0].mxu0
        %v1248 = vadd.f32 0.0, %v1247
        %v1249 = vpop.f32.mrb[0].mxu0
        %v1250 = vadd.f32 0.0, %v1249
        %v1251 = vpop.f32.mrb[0].mxu0
        %v1252 = vadd.f32 0.0, %v1251
        %1253 = vdwg.mxu0
        %1254 = vmatprep.subr.bf16.mxu0 %v936
        %1255 = vmatpush1.bf16.msra.mxu0 %v935
        %1256 = vmatprep.subr.bf16.mxu0 %v940
        %1257 = vmatpush1.bf16.msra.mxu0 %v939
        %1258 = vmatprep.subr.bf16.mxu0 %v944
        %1259 = vmatpush1.bf16.msra.mxu0 %v943
        %1260 = vmatprep.subr.bf16.mxu0 %v948
        %1261 = vmatpush1.bf16.msra.mxu0 %v947
        %1262 = vmatprep.subr.bf16.mxu0 %v952
        %1263 = vmatpush1.bf16.msra.mxu0 %v951
        %1264 = vmatprep.subr.bf16.mxu0 %v956
        %1265 = vmatpush1.bf16.msra.mxu0 %v955
        %1266 = vmatprep.subr.bf16.mxu0 %v960
        %1267 = vmatpush1.bf16.msra.mxu0 %v959
        %1268 = vmatprep.subr.bf16.mxu0 %v964
        %1269 = vmatpush1.bf16.msra.mxu0 %v963
        %1270 = vmatprep.subr.bf16.mxu0 %v968
        %1271 = vmatpush1.bf16.msra.mxu0 %v967
        %1272 = vmatprep.subr.bf16.mxu0 %v972
        %1273 = vmatpush1.bf16.msra.mxu0 %v971
        %1274 = vmatprep.subr.bf16.mxu0 %v976
        %1275 = vmatpush1.bf16.msra.mxu0 %v975
        %1276 = vmatprep.subr.bf16.mxu0 %v980
        %1277 = vmatpush1.bf16.msra.mxu0 %v979
        %1278 = vmatprep.subr.bf16.mxu0 %v984
        %1279 = vmatpush1.bf16.msra.mxu0 %v983
        %1280 = vmatprep.subr.bf16.mxu0 %v988
        %1281 = vmatpush1.bf16.msra.mxu0 %v987
        %1282 = vmatprep.subr.bf16.mxu0 %v992
        %1283 = vmatpush1.bf16.msra.mxu0 %v991
        %1284 = vmatprep.subr.bf16.mxu0 %v996
        %1285 = vmatpush1.bf16.msra.mxu0 %v995
        %1286 = vmatprep.mubr.bf16.mxu0 %v480
        %1287 = vmatmul.mubr.bf16.gmra.mrb[0].mxu0 %v479
        %v1288 = vpop.f32.mrb[0].mxu0
        %v1289 = vadd.f32 %v1246, %v1288
        %v1290 = vpop.f32.mrb[0].mxu0
        %v1291 = vadd.f32 %v1248, %v1290
        %v1292 = vpop.f32.mrb[0].mxu0
        %v1293 = vadd.f32 %v1250, %v1292
        %v1294 = vpop.f32.mrb[0].mxu0
        %v1295 = vadd.f32 %v1252, %v1294
        %1296 = vdwg.mxu0
        %v1297 = vadd.f32 %v325, %v1203
        %v1298 = vadd.f32 %v326, %v1205
        %v1299 = vadd.f32 %v327, %v1289
        %v1300 = vadd.f32 %v328, %v1291
        %v1301 = vadd.f32 %v329, %v1207
        %v1302 = vadd.f32 %v330, %v1209
        %v1303 = vadd.f32 %v331, %v1293
        %v1304 = vadd.f32 %v332, %v1295
        %1305 = vst [vmem:[#allocation2] sm:$0xff] %v1297
        %1306 = vst [vmem:[#allocation2 + $0x8] sm:$0xff] %v1298
        %1307 = vst [vmem:[#allocation2 + $0x10] sm:$0xff] %v1299
        %1308 = vst [vmem:[#allocation2 + $0x18] sm:$0xff] %v1300
        %1309 = vst [vmem:[#allocation2 + $0x20] sm:$0xff] %v1301
        %1310 = vst [vmem:[#allocation2 + $0x28] sm:$0xff] %v1302
        %1311 = vst [vmem:[#allocation2 + $0x30] sm:$0xff] %v1303
        %1312 = vst [vmem:[#allocation2 + $0x38] sm:$0xff] %v1304
        %p1313 = scmp.eq.s32.totalorder %s28, 1
        // Predicated region
        $region57: #{tpu_custom_call.1} parent=39 // pred_check
          %p1314 = pneg %p1313
        $region58: #{tpu_custom_call.1} parent=39 // pred_check_branch
          %1316 = sbr.rel (%p1314) target = $region60
        $region59: #{tpu_custom_call.1} parent=39 // pred_region
          %v1317 = vld [vmem:[#allocation2] sm:$0xff]
          %v1318 = vld [vmem:[#allocation2 + $0x8] sm:$0xff]
          %v1319 = vld [vmem:[#allocation2 + $0x10] sm:$0xff]
          %v1320 = vld [vmem:[#allocation2 + $0x18] sm:$0xff]
          %v1321 = vld [vmem:[#allocation2 + $0x20] sm:$0xff]
          %v1322 = vld [vmem:[#allocation2 + $0x28] sm:$0xff]
          %v1323 = vld [vmem:[#allocation2 + $0x30] sm:$0xff]
          %v1324 = vld [vmem:[#allocation2 + $0x38] sm:$0xff]
          %v1325 = vld [vmem:[%s2] sm:$0xf]
          %v1327 = vlaneseq
          %v1328 = vshrl.u32 %v1327, 7
          %v1329 = vsub.s32 0, %v1328
          %v1330 = vrot.slane %v1325, %v1329
          %v1331 = vlaneseq
          %v1332 = vshrl.u32 %v1331, 7
          %v1333 = vsub.s32 1, %v1332
          %v1334 = vrot.slane %v1325, %v1333
          %v1335 = vlaneseq
          %v1336 = vshrl.u32 %v1335, 7
          %v1337 = vsub.s32 2, %v1336
          %v1338 = vrot.slane %v1325, %v1337
          %v1339 = vlaneseq
          %v1340 = vshrl.u32 %v1339, 7
          %v1341 = vsub.s32 3, %v1340
          %v1342 = vrot.slane %v1325, %v1341
          %v1347 = vadd.f32 %v1317, %v1330
          %v1348 = vadd.f32 %v1318, %v1334
          %v1349 = vadd.f32 %v1319, %v1338
          %v1350 = vadd.f32 %v1320, %v1342
          %v1351 = vadd.f32 %v1321, %v1330
          %v1352 = vadd.f32 %v1322, %v1334
          %v1353 = vadd.f32 %v1323, %v1338
          %v1354 = vadd.f32 %v1324, %v1342
          %v1355 = vpack.c.bf16 %v1351, %v1347
          %v1356 = vpack.c.bf16 %v1352, %v1348
          %v1357 = vpack.c.bf16 %v1353, %v1349
          %v1358 = vpack.c.bf16 %v1354, %v1350
          %v1359 = vld [vmem:[#allocation8] sm:$0xf]
          %v1360 = vld [vmem:[#allocation8 + $0x4] sm:$0xf]
          %v1361 = vld [vmem:[#allocation8 + $0x8] sm:$0xf]
          %v1362 = vld [vmem:[#allocation8 + $0xc] sm:$0xf]
          %v1363 = vld [vmem:[#allocation8 + $0x10] sm:$0xf]
          %v1364 = vld [vmem:[#allocation8 + $0x14] sm:$0xf]
          %v1365 = vld [vmem:[#allocation8 + $0x18] sm:$0xf]
          %v1366 = vld [vmem:[#allocation8 + $0x1c] sm:$0xf]
          %v1367 = vld [vmem:[#allocation8 + $0x20] sm:$0xf]
          %v1368 = vld [vmem:[#allocation8 + $0x24] sm:$0xf]
          %v1369 = vld [vmem:[#allocation8 + $0x28] sm:$0xf]
          %v1370 = vld [vmem:[#allocation8 + $0x2c] sm:$0xf]
          %v1371 = vld [vmem:[#allocation8 + $0x30] sm:$0xf]
          %v1372 = vld [vmem:[#allocation8 + $0x34] sm:$0xf]
          %v1373 = vld [vmem:[#allocation8 + $0x38] sm:$0xf]
          %v1374 = vld [vmem:[#allocation8 + $0x3c] sm:$0xf]
          %v1375 = vld [vmem:[#allocation8 + $0x40] sm:$0xf]
          %v1376 = vld [vmem:[#allocation8 + $0x44] sm:$0xf]
          %v1377 = vld [vmem:[#allocation8 + $0x48] sm:$0xf]
          %v1378 = vld [vmem:[#allocation8 + $0x4c] sm:$0xf]
          %v1379 = vld [vmem:[#allocation8 + $0x50] sm:$0xf]
          %v1380 = vld [vmem:[#allocation8 + $0x54] sm:$0xf]
          %v1381 = vld [vmem:[#allocation8 + $0x58] sm:$0xf]
          %v1382 = vld [vmem:[#allocation8 + $0x5c] sm:$0xf]
          %v1383 = vld [vmem:[#allocation8 + $0x60] sm:$0xf]
          %v1384 = vld [vmem:[#allocation8 + $0x64] sm:$0xf]
          %v1385 = vld [vmem:[#allocation8 + $0x68] sm:$0xf]
          %v1386 = vld [vmem:[#allocation8 + $0x6c] sm:$0xf]
          %v1387 = vld [vmem:[#allocation8 + $0x70] sm:$0xf]
          %v1388 = vld [vmem:[#allocation8 + $0x74] sm:$0xf]
          %v1389 = vld [vmem:[#allocation8 + $0x78] sm:$0xf]
          %v1390 = vld [vmem:[#allocation8 + $0x7c] sm:$0xf]
          %v1391 = vld [vmem:[#allocation8 + $0x80] sm:$0xf]
          %v1392 = vld [vmem:[#allocation8 + $0x84] sm:$0xf]
          %v1393 = vld [vmem:[#allocation8 + $0x88] sm:$0xf]
          %v1394 = vld [vmem:[#allocation8 + $0x8c] sm:$0xf]
          %v1395 = vld [vmem:[#allocation8 + $0x90] sm:$0xf]
          %v1396 = vld [vmem:[#allocation8 + $0x94] sm:$0xf]
          %v1397 = vld [vmem:[#allocation8 + $0x98] sm:$0xf]
          %v1398 = vld [vmem:[#allocation8 + $0x9c] sm:$0xf]
          %v1399 = vld [vmem:[#allocation8 + $0xa0] sm:$0xf]
          %v1400 = vld [vmem:[#allocation8 + $0xa4] sm:$0xf]
          %v1401 = vld [vmem:[#allocation8 + $0xa8] sm:$0xf]
          %v1402 = vld [vmem:[#allocation8 + $0xac] sm:$0xf]
          %v1403 = vld [vmem:[#allocation8 + $0xb0] sm:$0xf]
          %v1404 = vld [vmem:[#allocation8 + $0xb4] sm:$0xf]
          %v1405 = vld [vmem:[#allocation8 + $0xb8] sm:$0xf]
          %v1406 = vld [vmem:[#allocation8 + $0xbc] sm:$0xf]
          %v1407 = vld [vmem:[#allocation8 + $0xc0] sm:$0xf]
          %v1408 = vld [vmem:[#allocation8 + $0xc4] sm:$0xf]
          %v1409 = vld [vmem:[#allocation8 + $0xc8] sm:$0xf]
          %v1410 = vld [vmem:[#allocation8 + $0xcc] sm:$0xf]
          %v1411 = vld [vmem:[#allocation8 + $0xd0] sm:$0xf]
          %v1412 = vld [vmem:[#allocation8 + $0xd4] sm:$0xf]
          %v1413 = vld [vmem:[#allocation8 + $0xd8] sm:$0xf]
          %v1414 = vld [vmem:[#allocation8 + $0xdc] sm:$0xf]
          %v1415 = vld [vmem:[#allocation8 + $0xe0] sm:$0xf]
          %v1416 = vld [vmem:[#allocation8 + $0xe4] sm:$0xf]
          %v1417 = vld [vmem:[#allocation8 + $0xe8] sm:$0xf]
          %v1418 = vld [vmem:[#allocation8 + $0xec] sm:$0xf]
          %v1419 = vld [vmem:[#allocation8 + $0xf0] sm:$0xf]
          %v1420 = vld [vmem:[#allocation8 + $0xf4] sm:$0xf]
          %v1421 = vld [vmem:[#allocation8 + $0xf8] sm:$0xf]
          %v1422 = vld [vmem:[#allocation8 + $0xfc] sm:$0xf]
          %v1423 = vld [vmem:[%s4] sm:$0x1]
          %v1425 = vlaneseq
          %v1426 = vshrl.u32 %v1425, 7
          %v1427 = vsub.s32 0, %v1426
          %v1428 = vrot.slane %v1423, %v1427
          %v1494 = vunpack.c.l.b16 %v1359
          %v1495 = vunpack.c.l.b16 %v1360
          %v1496 = vunpack.c.l.b16 %v1361
          %v1497 = vunpack.c.l.b16 %v1362
          %v1498 = vunpack.c.l.b16 %v1363
          %v1499 = vunpack.c.l.b16 %v1364
          %v1500 = vunpack.c.l.b16 %v1365
          %v1501 = vunpack.c.l.b16 %v1366
          %v1502 = vunpack.c.l.b16 %v1367
          %v1503 = vunpack.c.l.b16 %v1368
          %v1504 = vunpack.c.l.b16 %v1369
          %v1505 = vunpack.c.l.b16 %v1370
          %v1506 = vunpack.c.l.b16 %v1371
          %v1507 = vunpack.c.l.b16 %v1372
          %v1508 = vunpack.c.l.b16 %v1373
          %v1509 = vunpack.c.l.b16 %v1374
          %v1510 = vunpack.c.l.b16 %v1375
          %v1511 = vunpack.c.l.b16 %v1376
          %v1512 = vunpack.c.l.b16 %v1377
          %v1513 = vunpack.c.l.b16 %v1378
          %v1514 = vunpack.c.l.b16 %v1379
          %v1515 = vunpack.c.l.b16 %v1380
          %v1516 = vunpack.c.l.b16 %v1381
          %v1517 = vunpack.c.l.b16 %v1382
          %v1518 = vunpack.c.l.b16 %v1383
          %v1519 = vunpack.c.l.b16 %v1384
          %v1520 = vunpack.c.l.b16 %v1385
          %v1521 = vunpack.c.l.b16 %v1386
          %v1522 = vunpack.c.l.b16 %v1387
          %v1523 = vunpack.c.l.b16 %v1388
          %v1524 = vunpack.c.l.b16 %v1389
          %v1525 = vunpack.c.l.b16 %v1390
          %v1526 = vunpack.c.l.b16 %v1391
          %v1527 = vunpack.c.l.b16 %v1392
          %v1528 = vunpack.c.l.b16 %v1393
          %v1529 = vunpack.c.l.b16 %v1394
          %v1530 = vunpack.c.l.b16 %v1395
          %v1531 = vunpack.c.l.b16 %v1396
          %v1532 = vunpack.c.l.b16 %v1397
          %v1533 = vunpack.c.l.b16 %v1398
          %v1534 = vunpack.c.l.b16 %v1399
          %v1535 = vunpack.c.l.b16 %v1400
          %v1536 = vunpack.c.l.b16 %v1401
          %v1537 = vunpack.c.l.b16 %v1402
          %v1538 = vunpack.c.l.b16 %v1403
          %v1539 = vunpack.c.l.b16 %v1404
          %v1540 = vunpack.c.l.b16 %v1405
          %v1541 = vunpack.c.l.b16 %v1406
          %v1542 = vunpack.c.l.b16 %v1407
          %v1543 = vunpack.c.l.b16 %v1408
          %v1544 = vunpack.c.l.b16 %v1409
          %v1545 = vunpack.c.l.b16 %v1410
          %v1546 = vunpack.c.l.b16 %v1411
          %v1547 = vunpack.c.l.b16 %v1412
          %v1548 = vunpack.c.l.b16 %v1413
          %v1549 = vunpack.c.l.b16 %v1414
          %v1550 = vunpack.c.l.b16 %v1415
          %v1551 = vunpack.c.l.b16 %v1416
          %v1552 = vunpack.c.l.b16 %v1417
          %v1553 = vunpack.c.l.b16 %v1418
          %v1554 = vunpack.c.l.b16 %v1419
          %v1555 = vunpack.c.l.b16 %v1420
          %v1556 = vunpack.c.l.b16 %v1421
          %v1557 = vunpack.c.l.b16 %v1422
          %v1558 = vpack.c.b16 %v1495, %v1494
          %v1559 = vpack.c.b16 %v1497, %v1496
          %v1560 = vpack.c.b16 %v1499, %v1498
          %v1561 = vpack.c.b16 %v1501, %v1500
          %v1562 = vpack.c.b16 %v1503, %v1502
          %v1563 = vpack.c.b16 %v1505, %v1504
          %v1564 = vpack.c.b16 %v1507, %v1506
          %v1565 = vpack.c.b16 %v1509, %v1508
          %v1566 = vpack.c.b16 %v1511, %v1510
          %v1567 = vpack.c.b16 %v1513, %v1512
          %v1568 = vpack.c.b16 %v1515, %v1514
          %v1569 = vpack.c.b16 %v1517, %v1516
          %v1570 = vpack.c.b16 %v1519, %v1518
          %v1571 = vpack.c.b16 %v1521, %v1520
          %v1572 = vpack.c.b16 %v1523, %v1522
          %v1573 = vpack.c.b16 %v1525, %v1524
          %v1574 = vpack.c.b16 %v1527, %v1526
          %v1575 = vpack.c.b16 %v1529, %v1528
          %v1576 = vpack.c.b16 %v1531, %v1530
          %v1577 = vpack.c.b16 %v1533, %v1532
          %v1578 = vpack.c.b16 %v1535, %v1534
          %v1579 = vpack.c.b16 %v1537, %v1536
          %v1580 = vpack.c.b16 %v1539, %v1538
          %v1581 = vpack.c.b16 %v1541, %v1540
          %v1582 = vpack.c.b16 %v1543, %v1542
          %v1583 = vpack.c.b16 %v1545, %v1544
          %v1584 = vpack.c.b16 %v1547, %v1546
          %v1585 = vpack.c.b16 %v1549, %v1548
          %v1586 = vpack.c.b16 %v1551, %v1550
          %v1587 = vpack.c.b16 %v1553, %v1552
          %v1588 = vpack.c.b16 %v1555, %v1554
          %v1589 = vpack.c.b16 %v1557, %v1556
          %1622 = vmatprep.subr.bf16.mxu0 0
          %1623 = vmatpush1.bf16.msra.mxu0 %v1558
          %1624 = vmatprep.subr.bf16.mxu0 0
          %1625 = vmatpush1.bf16.msra.mxu0 %v1559
          %1626 = vmatprep.subr.bf16.mxu0 0
          %1627 = vmatpush1.bf16.msra.mxu0 %v1560
          %1628 = vmatprep.subr.bf16.mxu0 0
          %1629 = vmatpush1.bf16.msra.mxu0 %v1561
          %1630 = vmatprep.subr.bf16.mxu0 0
          %1631 = vmatpush1.bf16.msra.mxu0 %v1562
          %1632 = vmatprep.subr.bf16.mxu0 0
          %1633 = vmatpush1.bf16.msra.mxu0 %v1563
          %1634 = vmatprep.subr.bf16.mxu0 0
          %1635 = vmatpush1.bf16.msra.mxu0 %v1564
          %1636 = vmatprep.subr.bf16.mxu0 0
          %1637 = vmatpush1.bf16.msra.mxu0 %v1565
          %1638 = vmatprep.subr.bf16.mxu0 0
          %1639 = vmatpush1.bf16.msra.mxu0 %v1566
          %1640 = vmatprep.subr.bf16.mxu0 0
          %1641 = vmatpush1.bf16.msra.mxu0 %v1567
          %1642 = vmatprep.subr.bf16.mxu0 0
          %1643 = vmatpush1.bf16.msra.mxu0 %v1568
          %1644 = vmatprep.subr.bf16.mxu0 0
          %1645 = vmatpush1.bf16.msra.mxu0 %v1569
          %1646 = vmatprep.subr.bf16.mxu0 0
          %1647 = vmatpush1.bf16.msra.mxu0 %v1570
          %1648 = vmatprep.subr.bf16.mxu0 0
          %1649 = vmatpush1.bf16.msra.mxu0 %v1571
          %1650 = vmatprep.subr.bf16.mxu0 0
          %1651 = vmatpush1.bf16.msra.mxu0 %v1572
          %1652 = vmatprep.subr.bf16.mxu0 0
          %1653 = vmatpush1.bf16.msra.mxu0 %v1573
          %1654 = vmatprep.mubr.bf16.mxu0 %v1356
          %1655 = vmatmul.mubr.bf16.gmra.mrb[0].mxu0 %v1355
          %v1656 = vpop.f32.mrb[0].mxu0
          %v1657 = vadd.f32 %v1428, %v1656
          %v1658 = vpop.f32.mrb[0].mxu0
          %v1659 = vpop.f32.mrb[0].mxu0
          %v1660 = vadd.f32 %v1428, %v1659
          %v1661 = vpop.f32.mrb[0].mxu0
          %1662 = vdwg.mxu0
          %1663 = vmatprep.subr.bf16.mxu0 0
          %1664 = vmatpush1.bf16.msra.mxu0 %v1574
          %1665 = vmatprep.subr.bf16.mxu0 0
          %1666 = vmatpush1.bf16.msra.mxu0 %v1575
          %1667 = vmatprep.subr.bf16.mxu0 0
          %1668 = vmatpush1.bf16.msra.mxu0 %v1576
          %1669 = vmatprep.subr.bf16.mxu0 0
          %1670 = vmatpush1.bf16.msra.mxu0 %v1577
          %1671 = vmatprep.subr.bf16.mxu0 0
          %1672 = vmatpush1.bf16.msra.mxu0 %v1578
          %1673 = vmatprep.subr.bf16.mxu0 0
          %1674 = vmatpush1.bf16.msra.mxu0 %v1579
          %1675 = vmatprep.subr.bf16.mxu0 0
          %1676 = vmatpush1.bf16.msra.mxu0 %v1580
          %1677 = vmatprep.subr.bf16.mxu0 0
          %1678 = vmatpush1.bf16.msra.mxu0 %v1581
          %1679 = vmatprep.subr.bf16.mxu0 0
          %1680 = vmatpush1.bf16.msra.mxu0 %v1582
          %1681 = vmatprep.subr.bf16.mxu0 0
          %1682 = vmatpush1.bf16.msra.mxu0 %v1583
          %1683 = vmatprep.subr.bf16.mxu0 0
          %1684 = vmatpush1.bf16.msra.mxu0 %v1584
          %1685 = vmatprep.subr.bf16.mxu0 0
          %1686 = vmatpush1.bf16.msra.mxu0 %v1585
          %1687 = vmatprep.subr.bf16.mxu0 0
          %1688 = vmatpush1.bf16.msra.mxu0 %v1586
          %1689 = vmatprep.subr.bf16.mxu0 0
          %1690 = vmatpush1.bf16.msra.mxu0 %v1587
          %1691 = vmatprep.subr.bf16.mxu0 0
          %1692 = vmatpush1.bf16.msra.mxu0 %v1588
          %1693 = vmatprep.subr.bf16.mxu0 0
          %1694 = vmatpush1.bf16.msra.mxu0 %v1589
          %1695 = vmatprep.mubr.bf16.mxu0 %v1358
          %1696 = vmatmul.mubr.bf16.gmra.mrb[0].mxu0 %v1357
          %v1697 = vpop.f32.mrb[0].mxu0
          %v1698 = vadd.f32 %v1657, %v1697
          %v1699 = vpop.f32.mrb[0].mxu0
          %v1700 = vpop.f32.mrb[0].mxu0
          %v1701 = vadd.f32 %v1660, %v1700
          %v1702 = vpop.f32.mrb[0].mxu0
          %1703 = vdwg.mxu0
          %v1704 = vlaneseq
          %v1705 = vand.u32 %v1704, 127
          %vm1706 = vcmp.lt.s32.totalorder %v1705, 8
          %vm1707 = vcmp.ge.s32.totalorder %v1705, 16
          %vm1708 = vcmp.lt.s32.totalorder %v1705, 24
          %vm1709 = vmand %vm1707, %vm1708
          %v1710 = vsel %vm1706, %v1698, -inf
          %v1711 = vsel %vm1706, %v1701, -inf
          %1712 = vmax.xlane.f32.xlu0 %v1710
          %v1713 = vpop.xlane.xlu0 %1712
          %1714 = vmax.xlane.f32.xlu0 %v1711
          %v1715 = vpop.xlane.xlu0 %1714
          %v1716 = vsub.f32 %v1710, %v1713
          %v1717 = vsub.f32 %v1711, %v1715
          %v1718 = vmul.f32 %v1716, 1.442695
          %v1719 = vpow.pop %v1718
          %v1720 = vmul.f32 %v1717, 1.442695
          %v1721 = vpow.pop %v1720
          %v1722 = vsel %vm1706, %v1719, 0.0
          %v1723 = vsel %vm1706, %v1721, 0.0
          %1724 = vadd.xlane.f32.xlu0 %v1722
          %v1725 = vpop.xlane.xlu0 %1724
          %1726 = vadd.xlane.f32.xlu0 %v1723
          %v1727 = vpop.xlane.xlu0 %1726
          %v1728 = vrcp.pop %v1725
          %v1729 = vrcp.pop %v1727
          %v1730 = vmul.f32 %v1722, %v1728
          %v1731 = vmul.f32 %v1723, %v1729
          %v1732 = vmul.f32 %v1698, 1.442695
          %v1733 = vpow.pop %v1732
          %v1734 = vmul.f32 %v1701, 1.442695
          %v1735 = vpow.pop %v1734
          %v1736 = vsel %vm1709, %v1733, %v1698
          %v1737 = vsel %vm1709, %v1735, %v1701
          %v1738 = vsel %vm1706, %v1730, %v1736
          %v1739 = vsel %vm1706, %v1731, %v1737
          %1740 = vst [vmem:[#allocation9] sm:$0xff] %v1738
          %1741 = vst [vmem:[#allocation9 + $0x8] sm:$0xff] %v1739
        $region60: #{tpu_custom_call.1} parent=39 // pred_fallthru
          _
        // Predicated region
        $region61: #{tpu_custom_call.1} parent=39 // pred_check
          %p1742 = pneg %p170
        $region62: #{tpu_custom_call.1} parent=39 // pred_check_branch
          %1744 = sbr.rel (%p1742) target = $region64
        $region63: #{tpu_custom_call.1} parent=39 // pred_region
          %s1745 = smul.u32 2, %s27
          %s1747 = ssub.s32 256, 256
          %1748 = vsyncadd [#allocation5], %s1747
          %s1749 = smul.addr %s1745, 128
          %s1750 = scalar_lea.hbm %s5, %s1749
          %s1751 = sshll.u32 [#allocation9], 4
          %s1752 = int_to_ptr.vmem [resolvable:$true] %s1751
          %1757 = dma.vmem_to_hbm [thread:$0]  %s1752, 256, %s1750, [#allocation5], 128, 128, 8
        $region64: #{tpu_custom_call.1} parent=39 // pred_fallthru
          _
        // Predicated region
        $region65: #{tpu_custom_call.1} parent=39 // pred_check
          %p1758 = pneg %p170
        $region66: #{tpu_custom_call.1} parent=39 // pred_check_branch
          %1760 = sbr.rel (%p1758) target = $region68
        $region67: #{tpu_custom_call.1} parent=39 // pred_region
          %1761 = dma.done [#allocation5], 256
        $region68: #{tpu_custom_call.1} parent=39 // pred_fallthru
          _
      $region40: #{tpu_custom_call.1} parent=5 // pred_fallthru
        _
      %p1762 = scmp.le.s32.totalorder 2, %s18
      // Predicated region
      $region69: #{tpu_custom_call.1} parent=5 // pred_check
        %p1763 = pneg %p1762
      $region70: #{tpu_custom_call.1} parent=5 // pred_check_branch
        %1765 = sbr.rel (%p1763) target = $region72
      $region71: #{tpu_custom_call.1} parent=5 // pred_region
        %s1766 = ssub.s32 %s18, 2
      $region72: #{tpu_custom_call.1} parent=5 // pred_fallthru
        _
    $region6: #{tpu_custom_call.1} parent=1 // loop_footer
      %s22 = sadd.s32 1, %s18
    $region7: #{tpu_custom_call.1} parent=1 // loop_footer_branch
      %17 = sbr.rel target = $region3
    $region8: #{tpu_custom_call.1} parent=1 // loop_exit
      _
    %1767 = vsyncpa [#allocation4], 1
    %s1768 = scalar_lea.sflag [#allocation4], 1
    %1769 = vsyncpa %s1768, 1
    %1770 = vsyncpa [#allocation7], 1
    %s1771 = scalar_lea.sflag [#allocation7], 1
    %1772 = vsyncpa %s1771, 1
    %1773 = vsyncpa [#allocation5], 1
    %s1774 = scalar_lea.sflag [#allocation5], 1
    %1775 = vsyncpa %s1774, 1

</llo_original>
